<compile_context>
chip_gen: v5e
topology: v5e:2x2
jax: 0.10.0
libtpu: 0.0.40
codegen_flags: <defaults>
</compile_context>

<pallas_src>
import functools

import jax
import jax.numpy as jnp
import numpy as np
from jax import lax
from jax.experimental import pallas as pl
from jax.experimental.pallas import tpu as pltpu

LN_EPS = 1e-5  # nn.LayerNorm default


# ---------------------------------------------------------------------------
# in-kernel math helpers (elementwise / row reductions, lower cleanly in Mosaic)
# ---------------------------------------------------------------------------
def _layernorm(x, gamma, beta):
    mu = jnp.mean(x, axis=-1, keepdims=True)
    var = jnp.mean((x - mu) ** 2, axis=-1, keepdims=True)
    return (x - mu) * lax.rsqrt(var + LN_EPS) * gamma + beta


def _erf(x):
    # Abramowitz & Stegun 7.1.26 rational approximation (|err| < 1.5e-7):
    # only abs/exp/mul/add/reciprocal -> lowers on the TPU VPU/EUP.
    a1, a2, a3, a4, a5 = (0.254829592, -0.284496736, 1.421413741,
                          -1.453152027, 1.061405429)
    p = 0.3275911
    z = jnp.abs(x)
    t = pl.reciprocal(1.0 + p * z, approx=False)      # EUP, off the VPU path
    poly = ((((a5 * t + a4) * t + a3) * t + a2) * t + a1) * t
    y = 1.0 - poly * jnp.exp(-z * z)
    return jnp.where(x >= 0.0, y, -y)


def _gelu_exact(x):
    # torch F.gelu default is exact erf-GELU; we use a ~1e-7-accurate erf approx.
    return 0.5 * x * (1.0 + _erf(x * 0.7071067811865476))


# ---------------------------------------------------------------------------
# fused Pallas kernel: grid = (batch, layer); activation carried in VMEM scratch
# ---------------------------------------------------------------------------
def mtfem_kernel(x_ref,                       # (1, N, C)   input block (batch b)
                 wqkv_ref,                    # (1, C, 3C)  fused QKV weight, layer l
                 wo_ref,                      # (1, C, C)   proj_w.T, layer l
                 bo_ref,                      # (1, 1, C)
                 pre_g_ref, pre_b_ref,        # (1, 1, C)
                 n1_g_ref, n1_b_ref,          # (1, 1, C)
                 w1_ref, b1_ref,              # (1, C, C), (1, 1, C)
                 w2_ref, b2_ref,              # (1, C, C), (1, 1, C)
                 fin_g_ref, fin_b_ref,        # (1, C)
                 out_ref,                     # (1, N, C)
                 act_ref,                     # VMEM (N, C) f32: resident activation
                 cat_ref,                     # VMEM (N, C) f32: per-head outputs, concatenated
                 *, num_heads, is_query, matmul_dtype):
    l = pl.program_id(1)
    num_layers = pl.num_programs(1)

    # ---- load the input once per batch element (layer 0 of this b) ----------
    @pl.when(l == 0)
    def _():
        act_ref[...] = x_ref[0].astype(jnp.float32)

    x = act_ref[...]                                   # (N, C), f32
    N, C = x.shape
    d = C // num_heads
    scale = float(d) ** -0.5
    mdt = matmul_dtype

    # ---- pre-norm + fused QKV projection (one (N,C)@(C,3C) matmul) ----------
    xn = _layernorm(x, pre_g_ref[0], pre_b_ref[0])
    qkv = jnp.dot(xn.astype(mdt), wqkv_ref[0],
                  preferred_element_type=jnp.float32)  # (N, 3C), f32 accum

    # ---- masked multi-head attention ----------------------------------------
    for h in range(num_heads):                         # small static head loop
        q = qkv[:, h * d:(h + 1) * d]                  # (N, d)
        k = qkv[:, C + h * d:C + (h + 1) * d]
        v = qkv[:, 2 * C + h * d:2 * C + (h + 1) * d]
        if is_query:
            q_scores = jnp.sum(q * q, axis=-1, keepdims=True)   # (N, 1)
            q_mean = jnp.mean(q_scores, axis=-2, keepdims=True)
            q = q * (q_scores > q_mean).astype(q.dtype)
        s = lax.dot_general(q.astype(mdt), k.astype(mdt),       # q @ k^T
                            (((1,), (1,)), ((), ())),
                            preferred_element_type=jnp.float32) * scale
        s = s - jnp.max(s, axis=-1, keepdims=True)               # stable softmax
        p = jnp.exp(s)
        p = p * pl.reciprocal(jnp.sum(p, axis=-1, keepdims=True), approx=True)
        ho = jnp.dot(p.astype(mdt), v.astype(mdt),
                     preferred_element_type=jnp.float32)         # (N, d)
        cat_ref[:, h * d:(h + 1) * d] = ho             # lane-offset write, no concat op

    # one full-contraction output projection instead of H small (K=d) matmuls
    attn_out = jnp.dot(cat_ref[...].astype(mdt), wo_ref[0],
                       preferred_element_type=jnp.float32) + bo_ref[0]

    # ---- residual + norm1 + MLP + residual -----------------------------------
    src = x + attn_out
    src = _layernorm(src, n1_g_ref[0], n1_b_ref[0])
    h1 = _gelu_exact(jnp.dot(src.astype(mdt), w1_ref[0],
                             preferred_element_type=jnp.float32) + b1_ref[0])
    h2 = jnp.dot(h1.astype(mdt), w2_ref[0],
                 preferred_element_type=jnp.float32) + b2_ref[0]
    y = src + h2
    act_ref[...] = y                                   # carry to next layer

    # ---- final LayerNorm + the single HBM store (last layer only) -----------
    @pl.when(l == num_layers - 1)
    def _():
        out_ref[0] = _layernorm(y, fin_g_ref[...], fin_b_ref[...]).astype(out_ref.dtype)


# ---------------------------------------------------------------------------
# parameter packing (HBM-side: transpose + stack per-layer + bf16 cast ONCE)
# ---------------------------------------------------------------------------
def stack_kernel_params(params, matmul_dtype):
    layers = params["layers"]
    stk = lambda xs: jnp.stack(xs, 0)
    wqkv = stk([lp["qkv_w"].T for lp in layers]).astype(matmul_dtype)   # (L, C, 3C)
    wo = stk([lp["proj_w"].T for lp in layers]).astype(matmul_dtype)    # (L, C, C)
    bo = stk([lp["proj_b"][None] for lp in layers])                     # (L, 1, C)
    pre_g = stk([lp["pre_g"][None] for lp in layers])
    pre_b = stk([lp["pre_b"][None] for lp in layers])
    n1_g = stk([lp["n1_g"][None] for lp in layers])
    n1_b = stk([lp["n1_b"][None] for lp in layers])
    w1 = stk([lp["l1_w"].T for lp in layers]).astype(matmul_dtype)      # (L, C, C)
    b1 = stk([lp["l1_b"][None] for lp in layers])
    w2 = stk([lp["l2_w"].T for lp in layers]).astype(matmul_dtype)      # (L, C, C)
    b2 = stk([lp["l2_b"][None] for lp in layers])
    fin_g = params["final_g"][None]                                     # (1, C)
    fin_b = params["final_b"][None]
    return (wqkv, wo, bo, pre_g, pre_b, n1_g, n1_b, w1, b1, w2, b2, fin_g, fin_b)


def mtfem_forward(x_img, params, pos_emb, num_heads, is_query,
                  matmul_dtype=jnp.bfloat16, vmem_limit_bytes=None):
    """x_img: (B, C, H, W) -> (B, H*W, C).  One fused pallas_call, grid=(B, L).

    matmul_dtype: jnp.bfloat16 (MXU-native, default) or jnp.float32 (exact);
    accumulation, LayerNorm, softmax and GELU always run in f32."""
    B, C, H, W = x_img.shape
    N = H * W
    x = x_img.reshape(B, C, N).transpose(0, 2, 1)      # flatten(2,3).transpose(-2,-1)
    x = (x + pos_emb).astype(jnp.float32)              # sine positional embedding

    kp = stack_kernel_params(params, matmul_dtype)
    num_layers = len(params["layers"])
    kernel = functools.partial(mtfem_kernel, num_heads=num_heads,
                               is_query=is_query, matmul_dtype=matmul_dtype)

    def layer_spec(a):                                 # per-layer weight block
        nd = a.ndim
        return pl.BlockSpec((1,) + a.shape[1:],
                            lambda b, l, _nd=nd: (l,) + (0,) * (_nd - 1))

    def const_spec(a):                                 # final-LN params (constant)
        nd = a.ndim
        return pl.BlockSpec(a.shape, lambda b, l, _nd=nd: (0,) * _nd)

    (wqkv, wo, bo, pre_g, pre_b, n1_g, n1_b, w1, b1, w2, b2, fin_g, fin_b) = kp
    in_specs = ([pl.BlockSpec((1, N, C), lambda b, l: (b, 0, 0))]
                + [layer_spec(a) for a in
                   (wqkv, wo, bo, pre_g, pre_b, n1_g, n1_b, w1, b1, w2, b2)]
                + [const_spec(fin_g), const_spec(fin_b)])

    return pl.pallas_call(
        kernel,
        out_shape=jax.ShapeDtypeStruct((B, N, C), jnp.float32),
        grid=(B, num_layers),                          # batch parallel, layer sequential
        in_specs=in_specs,
        out_specs=pl.BlockSpec((1, N, C), lambda b, l: (b, 0, 0)),
        scratch_shapes=[pltpu.VMEM((N, C), jnp.float32),   # resident activation
                        pltpu.VMEM((N, C), jnp.float32)],  # concatenated head outputs
        compiler_params=pltpu.CompilerParams(
            dimension_semantics=("parallel", "arbitrary"),
            vmem_limit_bytes=vmem_limit_bytes),
    )(x, *kp)


# ---------------------------------------------------------------------------
# parameter init / positional embedding (matches the PyTorch module)
# ---------------------------------------------------------------------------
def sinusoidal_embedding(n, dim):
    p = np.arange(n, dtype=np.float32)[:, None]
    i = np.arange(dim, dtype=np.float32)[None, :]
    angle = p / np.power(10000.0, (2.0 * np.floor(i / 2.0)) / dim)
    even = (np.arange(dim) % 2)[None, :] == 0
    pe = np.where(even, np.sin(angle), np.cos(angle))
    return jnp.asarray(pe[None], dtype=jnp.float32)          # (1, n, dim)


def trunc_normal(key, shape, std=0.02):
    return jax.random.truncated_normal(key, -2.0, 2.0, shape, jnp.float32) * std


def init_params(key, dim, num_layers):
    layers = []
    for _ in range(num_layers):
        key, k0, k1, k2, k3 = jax.random.split(key, 5)
        layers.append(dict(
            qkv_w=trunc_normal(k0, (3 * dim, dim)),           # qkv (no bias)
            proj_w=trunc_normal(k1, (dim, dim)),
            proj_b=jnp.zeros((dim,), jnp.float32),
            pre_g=jnp.ones((dim,), jnp.float32),
            pre_b=jnp.zeros((dim,), jnp.float32),
            n1_g=jnp.ones((dim,), jnp.float32),
            n1_b=jnp.zeros((dim,), jnp.float32),
            l1_w=trunc_normal(k2, (dim, dim)),
            l1_b=jnp.zeros((dim,), jnp.float32),
            l2_w=trunc_normal(k3, (dim, dim)),
            l2_b=jnp.zeros((dim,), jnp.float32),
        ))
    return dict(layers=layers,
                final_g=jnp.ones((dim,), jnp.float32),
                final_b=jnp.zeros((dim,), jnp.float32))


# ---------------------------------------------------------------------------
# pure-JAX reference (mirrors the PyTorch forward, eval-mode dropout)
# ---------------------------------------------------------------------------
def _ref_ln(x, g, b):
    mu = x.mean(-1, keepdims=True)
    var = ((x - mu) ** 2).mean(-1, keepdims=True)
    return (x - mu) / jnp.sqrt(var + LN_EPS) * g + b


def _ref_layer(src, lp, num_heads, is_query):
    B, N, C = src.shape
    d = C // num_heads
    x = _ref_ln(src, lp["pre_g"], lp["pre_b"])
    qkv = (x @ lp["qkv_w"].T).reshape(B, N, 3, num_heads, d).transpose(2, 0, 3, 1, 4)
    q, k, v = qkv[0], qkv[1], qkv[2]
    if is_query:
        qs = jnp.sum(q * q, axis=-1, keepdims=True)
        qm = jnp.mean(qs, axis=-2, keepdims=True)
        q = q * (qs > qm).astype(q.dtype)
    attn = (q @ jnp.swapaxes(k, -2, -1)) * (d ** -0.5)
    attn = jax.nn.softmax(attn, axis=-1)
    o = (attn @ v).transpose(0, 2, 1, 3).reshape(B, N, C)
    o = o @ lp["proj_w"].T + lp["proj_b"]
    src = src + o
    src = _ref_ln(src, lp["n1_g"], lp["n1_b"])
    h1 = jax.nn.gelu(src @ lp["l1_w"].T + lp["l1_b"], approximate=False)
    h2 = h1 @ lp["l2_w"].T + lp["l2_b"]
    return src + h2


def ref_forward(x_img, params, pos_emb, num_heads, is_query):
    B, C, H, W = x_img.shape
    x = x_img.reshape(B, C, H * W).transpose(0, 2, 1) + pos_emb
    for lp in params["layers"]:
        x = _ref_layer(x, lp, num_heads, is_query)
    return _ref_ln(x, params["final_g"], params["final_b"])


# ---------------------------------------------------------------------------
if __name__ == "__main__":
    B, DIM, Himg, Wimg = 2, 32, 4, 4          # embedding_dim=32, sequence_length=16
    NUM_HEADS, NUM_LAYERS = 2, 2
    N = Himg * Wimg

    key = jax.random.PRNGKey(0)
    kx, kp = jax.random.split(key)
    x = jax.random.normal(kx, (B, DIM, Himg, Wimg), jnp.float32)

    params = init_params(kp, DIM, NUM_LAYERS)
    pos_emb = sinusoidal_embedding(N, DIM)

    # exact-precision path (f32 matmul operands): tight tolerance, both modes
    for is_query in (False, True):
        out = jax.block_until_ready(
            mtfem_forward(x, params, pos_emb, NUM_HEADS, is_query,
                          matmul_dtype=jnp.float32))
        ref = ref_forward(x, params, pos_emb, NUM_HEADS, is_query)
        np.testing.assert_allclose(np.asarray(out), np.asarray(ref),
                                   rtol=5e-3, atol=5e-3)

    # default fast path (bf16 operands, f32 accumulation): looser tolerance.
    # is_query=False here: the bf16 q-score threshold can flip borderline mask
    # elements vs. the f32 reference, which is rounding-induced, not a bug.
    out_bf16 = jax.block_until_ready(
        mtfem_forward(x, params, pos_emb, NUM_HEADS, False))
    ref = ref_forward(x, params, pos_emb, NUM_HEADS, False)
    np.testing.assert_allclose(np.asarray(out_bf16), np.asarray(ref),
                               rtol=5e-2, atol=5e-2)

    print("KERNEL_OK")
</pallas_src>

<mosaic_0001>
module attributes {stable_mosaic.version = 11 : i64} {
  func.func @mtfem_kernel(%arg0: i32, %arg1: i32, %arg2: memref<1x16x32xf32, #tpu.memory_space<vmem>>, %arg3: memref<1x32x96xf32, #tpu.memory_space<vmem>>, %arg4: memref<1x32x32xf32, #tpu.memory_space<vmem>>, %arg5: memref<1x1x32xf32, #tpu.memory_space<vmem>>, %arg6: memref<1x1x32xf32, #tpu.memory_space<vmem>>, %arg7: memref<1x1x32xf32, #tpu.memory_space<vmem>>, %arg8: memref<1x1x32xf32, #tpu.memory_space<vmem>>, %arg9: memref<1x1x32xf32, #tpu.memory_space<vmem>>, %arg10: memref<1x32x32xf32, #tpu.memory_space<vmem>>, %arg11: memref<1x1x32xf32, #tpu.memory_space<vmem>>, %arg12: memref<1x32x32xf32, #tpu.memory_space<vmem>>, %arg13: memref<1x1x32xf32, #tpu.memory_space<vmem>>, %arg14: memref<1x32xf32, #tpu.memory_space<vmem>>, %arg15: memref<1x32xf32, #tpu.memory_space<vmem>>, %arg16: memref<1x16x32xf32, #tpu.memory_space<vmem>>, %arg17: memref<16x32xf32, #tpu.memory_space<vmem>>, %arg18: memref<16x32xf32, #tpu.memory_space<vmem>>) attributes {dimension_semantics = [#tpu.dimension_semantics<parallel>, #tpu.dimension_semantics<arbitrary>], iteration_bounds = array<i64: 2, 2>, scalar_prefetch = 0 : i64, scratch_operands = 2 : i64, tpu.core_type = #tpu.core_type<tc>, window_params = [{transform_indices = @transform_0, window_bounds = array<i64: 1, 16, 32>}, {transform_indices = @transform_1, window_bounds = array<i64: 1, 32, 96>}, {transform_indices = @transform_2, window_bounds = array<i64: 1, 32, 32>}, {transform_indices = @transform_3, window_bounds = array<i64: 1, 1, 32>}, {transform_indices = @transform_4, window_bounds = array<i64: 1, 1, 32>}, {transform_indices = @transform_5, window_bounds = array<i64: 1, 1, 32>}, {transform_indices = @transform_6, window_bounds = array<i64: 1, 1, 32>}, {transform_indices = @transform_7, window_bounds = array<i64: 1, 1, 32>}, {transform_indices = @transform_8, window_bounds = array<i64: 1, 32, 32>}, {transform_indices = @transform_9, window_bounds = array<i64: 1, 1, 32>}, {transform_indices = @transform_10, window_bounds = array<i64: 1, 32, 32>}, {transform_indices = @transform_11, window_bounds = array<i64: 1, 1, 32>}, {pipeline_mode = #tpu.pipeline_mode<synchronous>, transform_indices = @transform_12, window_bounds = array<i64: 1, 32>}, {pipeline_mode = #tpu.pipeline_mode<synchronous>, transform_indices = @transform_13, window_bounds = array<i64: 1, 32>}, {transform_indices = @transform_14, window_bounds = array<i64: 1, 16, 32>}]} {
    %c0_i32 = arith.constant 0 : i32
    %0 = arith.cmpi eq, %arg1, %c0_i32 : i32
    %1 = arith.extui %0 : i1 to i32
    %c0_i32_0 = arith.constant 0 : i32
    %2 = arith.cmpi ne, %1, %c0_i32_0 : i32
    scf.if %2 {
      %c0_80 = arith.constant 0 : index
      %c0_81 = arith.constant 0 : index
      %c0_82 = arith.constant 0 : index
      %162 = vector.load %arg2[%c0_80, %c0_81, %c0_82] : memref<1x16x32xf32, #tpu.memory_space<vmem>>, vector<1x16x32xf32>
      %163 = vector.shape_cast %162 : vector<1x16x32xf32> to vector<16x32xf32>
      %c0_83 = arith.constant 0 : index
      %c0_84 = arith.constant 0 : index
      %164 = vector.load %arg17[%c0_83, %c0_84] : memref<16x32xf32, #tpu.memory_space<vmem>>, vector<16x32xf32>
      tpu.vector_store %arg17[%c0_83, %c0_84], %163 {strides = array<i32>} : memref<16x32xf32, #tpu.memory_space<vmem>>, vector<16x32xf32>,
    } else {
    }
    %c0 = arith.constant 0 : index
    %c0_1 = arith.constant 0 : index
    %3 = vector.load %arg17[%c0, %c0_1] : memref<16x32xf32, #tpu.memory_space<vmem>>, vector<16x32xf32>
    %c0_2 = arith.constant 0 : index
    %c0_3 = arith.constant 0 : index
    %c0_4 = arith.constant 0 : index
    %4 = vector.load %arg6[%c0_2, %c0_3, %c0_4] : memref<1x1x32xf32, #tpu.memory_space<vmem>>, vector<1x1x32xf32>
    %5 = vector.shape_cast %4 : vector<1x1x32xf32> to vector<1x32xf32>
    %c0_5 = arith.constant 0 : index
    %c0_6 = arith.constant 0 : index
    %c0_7 = arith.constant 0 : index
    %6 = vector.load %arg7[%c0_5, %c0_6, %c0_7] : memref<1x1x32xf32, #tpu.memory_space<vmem>>, vector<1x1x32xf32>
    %7 = vector.shape_cast %6 : vector<1x1x32xf32> to vector<1x32xf32>
    %cst = arith.constant dense<0.000000e+00> : vector<16xf32>
    %8 = vector.multi_reduction <add>, %3, %cst [1] : vector<16x32xf32> to vector<16xf32>
    %9 = vector.shape_cast %8 : vector<16xf32> to vector<16x1xf32>
    %cst_8 = arith.constant 3.200000e+01 : f32
    %10 = vector.broadcast %cst_8 : f32 to vector<16x1xf32>
    %11 = arith.divf %9, %10 : vector<16x1xf32>
    %12 = vector.broadcast %11 : vector<16x1xf32> to vector<16x32xf32>
    %13 = arith.subf %3, %12 : vector<16x32xf32>
    %14 = arith.mulf %13, %13 : vector<16x32xf32>
    %cst_9 = arith.constant dense<0.000000e+00> : vector<16xf32>
    %15 = vector.multi_reduction <add>, %14, %cst_9 [1] : vector<16x32xf32> to vector<16xf32>
    %16 = vector.shape_cast %15 : vector<16xf32> to vector<16x1xf32>
    %cst_10 = arith.constant 3.200000e+01 : f32
    %17 = vector.broadcast %cst_10 : f32 to vector<16x1xf32>
    %18 = arith.divf %16, %17 : vector<16x1xf32>
    %19 = vector.broadcast %11 : vector<16x1xf32> to vector<16x32xf32>
    %20 = arith.subf %3, %19 : vector<16x32xf32>
    %cst_11 = arith.constant 9.99999974E-6 : f32
    %21 = vector.broadcast %cst_11 : f32 to vector<16x1xf32>
    %22 = arith.addf %18, %21 : vector<16x1xf32>
    %23 = math.rsqrt %22 : vector<16x1xf32>
    %24 = vector.broadcast %23 : vector<16x1xf32> to vector<16x32xf32>
    %25 = arith.mulf %20, %24 : vector<16x32xf32>
    %26 = vector.broadcast %5 : vector<1x32xf32> to vector<16x32xf32>
    %27 = arith.mulf %25, %26 : vector<16x32xf32>
    %28 = vector.broadcast %7 : vector<1x32xf32> to vector<16x32xf32>
    %29 = arith.addf %27, %28 : vector<16x32xf32>
    %c0_12 = arith.constant 0 : index
    %c0_13 = arith.constant 0 : index
    %c0_14 = arith.constant 0 : index
    %30 = vector.load %arg3[%c0_12, %c0_13, %c0_14] : memref<1x32x96xf32, #tpu.memory_space<vmem>>, vector<1x32x96xf32>
    %31 = vector.shape_cast %30 : vector<1x32x96xf32> to vector<32x96xf32>
    %cst_15 = arith.constant dense<0.000000e+00> : vector<16x96xf32>
    %32 = tpu.matmul %29, %31, %cst_15 {dimension_numbers = #tpu.dot_dimension_numbers<[1], [0], [0], [1], [0, 0, 1, 1], [], []>} : vector<16x32xf32>, vector<32x96xf32>, vector<16x96xf32> -> vector<16x96xf32>
    %33 = vector.extract_strided_slice %32 {offsets = [0, 0], sizes = [16, 16], strides = [1, 1]} : vector<16x96xf32> to vector<16x16xf32>
    %34 = vector.extract_strided_slice %32 {offsets = [0, 32], sizes = [16, 16], strides = [1, 1]} : vector<16x96xf32> to vector<16x16xf32>
    %35 = vector.extract_strided_slice %32 {offsets = [0, 64], sizes = [16, 16], strides = [1, 1]} : vector<16x96xf32> to vector<16x16xf32>
    %cst_16 = arith.constant dense<0.000000e+00> : vector<16x16xf32>
    %36 = tpu.matmul %33, %34, %cst_16 {dimension_numbers = #tpu.dot_dimension_numbers<[1], [1], [0], [0], [0, 0, 1, 0], [], []>} : vector<16x16xf32>, vector<16x16xf32>, vector<16x16xf32> -> vector<16x16xf32>
    %cst_17 = arith.constant 2.500000e-01 : f32
    %37 = vector.broadcast %cst_17 : f32 to vector<16x16xf32>
    %38 = arith.mulf %36, %37 : vector<16x16xf32>
    %cst_18 = arith.constant dense<0xFF800000> : vector<16xf32>
    %39 = vector.multi_reduction <maximumf>, %38, %cst_18 [1] : vector<16x16xf32> to vector<16xf32>
    %40 = vector.shape_cast %39 : vector<16xf32> to vector<16x1xf32>
    %41 = vector.broadcast %40 : vector<16x1xf32> to vector<16x16xf32>
    %42 = arith.subf %38, %41 : vector<16x16xf32>
    %43 = math.exp %42 : vector<16x16xf32>
    %cst_19 = arith.constant dense<0.000000e+00> : vector<16xf32>
    %44 = vector.multi_reduction <add>, %43, %cst_19 [1] : vector<16x16xf32> to vector<16xf32>
    %45 = vector.shape_cast %44 : vector<16xf32> to vector<16x1xf32>
    %46 = tpu.reciprocal %45 {approx = true} : vector<16x1xf32> -> vector<16x1xf32>
    %47 = vector.broadcast %46 : vector<16x1xf32> to vector<16x16xf32>
    %48 = arith.mulf %43, %47 : vector<16x16xf32>
    %cst_20 = arith.constant dense<0.000000e+00> : vector<16x16xf32>
    %49 = tpu.matmul %48, %35, %cst_20 {dimension_numbers = #tpu.dot_dimension_numbers<[1], [0], [0], [1], [0, 0, 1, 1], [], []>} : vector<16x16xf32>, vector<16x16xf32>, vector<16x16xf32> -> vector<16x16xf32>
    %c0_21 = arith.constant 0 : index
    %c0_22 = arith.constant 0 : index
    %50 = vector.load %arg18[%c0_21, %c0_22] : memref<16x32xf32, #tpu.memory_space<vmem>>, vector<16x16xf32>
    tpu.vector_store %arg18[%c0_21, %c0_22], %49 {strides = array<i32>} : memref<16x32xf32, #tpu.memory_space<vmem>>, vector<16x16xf32>,
    %51 = vector.extract_strided_slice %32 {offsets = [0, 16], sizes = [16, 16], strides = [1, 1]} : vector<16x96xf32> to vector<16x16xf32>
    %52 = vector.extract_strided_slice %32 {offsets = [0, 48], sizes = [16, 16], strides = [1, 1]} : vector<16x96xf32> to vector<16x16xf32>
    %53 = vector.extract_strided_slice %32 {offsets = [0, 80], sizes = [16, 16], strides = [1, 1]} : vector<16x96xf32> to vector<16x16xf32>
    %cst_23 = arith.constant dense<0.000000e+00> : vector<16x16xf32>
    %54 = tpu.matmul %51, %52, %cst_23 {dimension_numbers = #tpu.dot_dimension_numbers<[1], [1], [0], [0], [0, 0, 1, 0], [], []>} : vector<16x16xf32>, vector<16x16xf32>, vector<16x16xf32> -> vector<16x16xf32>
    %cst_24 = arith.constant 2.500000e-01 : f32
    %55 = vector.broadcast %cst_24 : f32 to vector<16x16xf32>
    %56 = arith.mulf %54, %55 : vector<16x16xf32>
    %cst_25 = arith.constant dense<0xFF800000> : vector<16xf32>
    %57 = vector.multi_reduction <maximumf>, %56, %cst_25 [1] : vector<16x16xf32> to vector<16xf32>
    %58 = vector.shape_cast %57 : vector<16xf32> to vector<16x1xf32>
    %59 = vector.broadcast %58 : vector<16x1xf32> to vector<16x16xf32>
    %60 = arith.subf %56, %59 : vector<16x16xf32>
    %61 = math.exp %60 : vector<16x16xf32>
    %cst_26 = arith.constant dense<0.000000e+00> : vector<16xf32>
    %62 = vector.multi_reduction <add>, %61, %cst_26 [1] : vector<16x16xf32> to vector<16xf32>
    %63 = vector.shape_cast %62 : vector<16xf32> to vector<16x1xf32>
    %64 = tpu.reciprocal %63 {approx = true} : vector<16x1xf32> -> vector<16x1xf32>
    %65 = vector.broadcast %64 : vector<16x1xf32> to vector<16x16xf32>
    %66 = arith.mulf %61, %65 : vector<16x16xf32>
    %cst_27 = arith.constant dense<0.000000e+00> : vector<16x16xf32>
    %67 = tpu.matmul %66, %53, %cst_27 {dimension_numbers = #tpu.dot_dimension_numbers<[1], [0], [0], [1], [0, 0, 1, 1], [], []>} : vector<16x16xf32>, vector<16x16xf32>, vector<16x16xf32> -> vector<16x16xf32>
    %c0_28 = arith.constant 0 : index
    %c16 = arith.constant 16 : index
    %68 = vector.load %arg18[%c0_28, %c16] : memref<16x32xf32, #tpu.memory_space<vmem>>, vector<16x16xf32>
    tpu.vector_store %arg18[%c0_28, %c16], %67 {strides = array<i32>} : memref<16x32xf32, #tpu.memory_space<vmem>>, vector<16x16xf32>,
    %c0_29 = arith.constant 0 : index
    %c0_30 = arith.constant 0 : index
    %69 = vector.load %arg18[%c0_29, %c0_30] : memref<16x32xf32, #tpu.memory_space<vmem>>, vector<16x32xf32>
    %c0_31 = arith.constant 0 : index
    %c0_32 = arith.constant 0 : index
    %c0_33 = arith.constant 0 : index
    %70 = vector.load %arg4[%c0_31, %c0_32, %c0_33] : memref<1x32x32xf32, #tpu.memory_space<vmem>>, vector<1x32x32xf32>
    %71 = vector.shape_cast %70 : vector<1x32x32xf32> to vector<32x32xf32>
    %cst_34 = arith.constant dense<0.000000e+00> : vector<16x32xf32>
    %72 = tpu.matmul %69, %71, %cst_34 {dimension_numbers = #tpu.dot_dimension_numbers<[1], [0], [0], [1], [0, 0, 1, 1], [], []>} : vector<16x32xf32>, vector<32x32xf32>, vector<16x32xf32> -> vector<16x32xf32>
    %c0_35 = arith.constant 0 : index
    %c0_36 = arith.constant 0 : index
    %c0_37 = arith.constant 0 : index
    %73 = vector.load %arg5[%c0_35, %c0_36, %c0_37] : memref<1x1x32xf32, #tpu.memory_space<vmem>>, vector<1x1x32xf32>
    %74 = vector.shape_cast %73 : vector<1x1x32xf32> to vector<1x32xf32>
    %75 = vector.broadcast %74 : vector<1x32xf32> to vector<16x32xf32>
    %76 = arith.addf %72, %75 : vector<16x32xf32>
    %77 = arith.addf %3, %76 : vector<16x32xf32>
    %c0_38 = arith.constant 0 : index
    %c0_39 = arith.constant 0 : index
    %c0_40 = arith.constant 0 : index
    %78 = vector.load %arg8[%c0_38, %c0_39, %c0_40] : memref<1x1x32xf32, #tpu.memory_space<vmem>>, vector<1x1x32xf32>
    %79 = vector.shape_cast %78 : vector<1x1x32xf32> to vector<1x32xf32>
    %c0_41 = arith.constant 0 : index
    %c0_42 = arith.constant 0 : index
    %c0_43 = arith.constant 0 : index
    %80 = vector.load %arg9[%c0_41, %c0_42, %c0_43] : memref<1x1x32xf32, #tpu.memory_space<vmem>>, vector<1x1x32xf32>
    %81 = vector.shape_cast %80 : vector<1x1x32xf32> to vector<1x32xf32>
    %cst_44 = arith.constant dense<0.000000e+00> : vector<16xf32>
    %82 = vector.multi_reduction <add>, %77, %cst_44 [1] : vector<16x32xf32> to vector<16xf32>
    %83 = vector.shape_cast %82 : vector<16xf32> to vector<16x1xf32>
    %cst_45 = arith.constant 3.200000e+01 : f32
    %84 = vector.broadcast %cst_45 : f32 to vector<16x1xf32>
    %85 = arith.divf %83, %84 : vector<16x1xf32>
    %86 = vector.broadcast %85 : vector<16x1xf32> to vector<16x32xf32>
    %87 = arith.subf %77, %86 : vector<16x32xf32>
    %88 = arith.mulf %87, %87 : vector<16x32xf32>
    %cst_46 = arith.constant dense<0.000000e+00> : vector<16xf32>
    %89 = vector.multi_reduction <add>, %88, %cst_46 [1] : vector<16x32xf32> to vector<16xf32>
    %90 = vector.shape_cast %89 : vector<16xf32> to vector<16x1xf32>
    %cst_47 = arith.constant 3.200000e+01 : f32
    %91 = vector.broadcast %cst_47 : f32 to vector<16x1xf32>
    %92 = arith.divf %90, %91 : vector<16x1xf32>
    %93 = vector.broadcast %85 : vector<16x1xf32> to vector<16x32xf32>
    %94 = arith.subf %77, %93 : vector<16x32xf32>
    %cst_48 = arith.constant 9.99999974E-6 : f32
    %95 = vector.broadcast %cst_48 : f32 to vector<16x1xf32>
    %96 = arith.addf %92, %95 : vector<16x1xf32>
    %97 = math.rsqrt %96 : vector<16x1xf32>
    %98 = vector.broadcast %97 : vector<16x1xf32> to vector<16x32xf32>
    %99 = arith.mulf %94, %98 : vector<16x32xf32>
    %100 = vector.broadcast %79 : vector<1x32xf32> to vector<16x32xf32>
    %101 = arith.mulf %99, %100 : vector<16x32xf32>
    %102 = vector.broadcast %81 : vector<1x32xf32> to vector<16x32xf32>
    %103 = arith.addf %101, %102 : vector<16x32xf32>
    %c0_49 = arith.constant 0 : index
    %c0_50 = arith.constant 0 : index
    %c0_51 = arith.constant 0 : index
    %104 = vector.load %arg10[%c0_49, %c0_50, %c0_51] : memref<1x32x32xf32, #tpu.memory_space<vmem>>, vector<1x32x32xf32>
    %105 = vector.shape_cast %104 : vector<1x32x32xf32> to vector<32x32xf32>
    %cst_52 = arith.constant dense<0.000000e+00> : vector<16x32xf32>
    %106 = tpu.matmul %103, %105, %cst_52 {dimension_numbers = #tpu.dot_dimension_numbers<[1], [0], [0], [1], [0, 0, 1, 1], [], []>} : vector<16x32xf32>, vector<32x32xf32>, vector<16x32xf32> -> vector<16x32xf32>
    %c0_53 = arith.constant 0 : index
    %c0_54 = arith.constant 0 : index
    %c0_55 = arith.constant 0 : index
    %107 = vector.load %arg11[%c0_53, %c0_54, %c0_55] : memref<1x1x32xf32, #tpu.memory_space<vmem>>, vector<1x1x32xf32>
    %108 = vector.shape_cast %107 : vector<1x1x32xf32> to vector<1x32xf32>
    %109 = vector.broadcast %108 : vector<1x32xf32> to vector<16x32xf32>
    %110 = arith.addf %106, %109 : vector<16x32xf32>
    %cst_56 = arith.constant 5.000000e-01 : f32
    %111 = vector.broadcast %cst_56 : f32 to vector<16x32xf32>
    %112 = arith.mulf %111, %110 : vector<16x32xf32>
    %cst_57 = arith.constant 0.707106769 : f32
    %113 = vector.broadcast %cst_57 : f32 to vector<16x32xf32>
    %114 = arith.mulf %110, %113 : vector<16x32xf32>
    %115 = math.absf %114 : vector<16x32xf32>
    %cst_58 = arith.constant 0.327591091 : f32
    %116 = vector.broadcast %cst_58 : f32 to vector<16x32xf32>
    %117 = arith.mulf %116, %115 : vector<16x32xf32>
    %cst_59 = arith.constant 1.000000e+00 : f32
    %118 = vector.broadcast %cst_59 : f32 to vector<16x32xf32>
    %119 = arith.addf %118, %117 : vector<16x32xf32>
    %120 = tpu.reciprocal %119 : vector<16x32xf32> -> vector<16x32xf32>
    %cst_60 = arith.constant 1.06140542 : f32
    %121 = vector.broadcast %cst_60 : f32 to vector<16x32xf32>
    %122 = arith.mulf %121, %120 : vector<16x32xf32>
    %cst_61 = arith.constant -1.45315206 : f32
    %123 = vector.broadcast %cst_61 : f32 to vector<16x32xf32>
    %124 = arith.addf %122, %123 : vector<16x32xf32>
    %125 = arith.mulf %124, %120 : vector<16x32xf32>
    %cst_62 = arith.constant 1.42141378 : f32
    %126 = vector.broadcast %cst_62 : f32 to vector<16x32xf32>
    %127 = arith.addf %125, %126 : vector<16x32xf32>
    %128 = arith.mulf %127, %120 : vector<16x32xf32>
    %cst_63 = arith.constant -0.284496725 : f32
    %129 = vector.broadcast %cst_63 : f32 to vector<16x32xf32>
    %130 = arith.addf %128, %129 : vector<16x32xf32>
    %131 = arith.mulf %130, %120 : vector<16x32xf32>
    %cst_64 = arith.constant 0.254829586 : f32
    %132 = vector.broadcast %cst_64 : f32 to vector<16x32xf32>
    %133 = arith.addf %131, %132 : vector<16x32xf32>
    %134 = arith.mulf %133, %120 : vector<16x32xf32>
    %cst_65 = arith.constant 0.000000e+00 : f32
    %135 = vector.broadcast %cst_65 : f32 to vector<16x32xf32>
    %136 = arith.subf %135, %115 : vector<16x32xf32>
    %137 = arith.mulf %136, %115 : vector<16x32xf32>
    %138 = math.exp %137 : vector<16x32xf32>
    %139 = arith.mulf %134, %138 : vector<16x32xf32>
    %cst_66 = arith.constant 1.000000e+00 : f32
    %140 = vector.broadcast %cst_66 : f32 to vector<16x32xf32>
    %141 = arith.subf %140, %139 : vector<16x32xf32>
    %cst_67 = arith.constant 0.000000e+00 : f32
    %142 = vector.broadcast %cst_67 : f32 to vector<16x32xf32>
    %143 = arith.cmpf oge, %114, %142 : vector<16x32xf32>
    %cst_68 = arith.constant 0.000000e+00 : f32
    %144 = vector.broadcast %cst_68 : f32 to vector<16x32xf32>
    %145 = arith.subf %144, %141 : vector<16x32xf32>
    %146 = arith.select %143, %141, %145 : vector<16x32xi1>, vector<16x32xf32>
    %cst_69 = arith.constant 1.000000e+00 : f32
    %147 = vector.broadcast %cst_69 : f32 to vector<16x32xf32>
    %148 = arith.addf %147, %146 : vector<16x32xf32>
    %149 = arith.mulf %112, %148 : vector<16x32xf32>
    %c0_70 = arith.constant 0 : index
    %c0_71 = arith.constant 0 : index
    %c0_72 = arith.constant 0 : index
    %150 = vector.load %arg12[%c0_70, %c0_71, %c0_72] : memref<1x32x32xf32, #tpu.memory_space<vmem>>, vector<1x32x32xf32>
    %151 = vector.shape_cast %150 : vector<1x32x32xf32> to vector<32x32xf32>
    %cst_73 = arith.constant dense<0.000000e+00> : vector<16x32xf32>
    %152 = tpu.matmul %149, %151, %cst_73 {dimension_numbers = #tpu.dot_dimension_numbers<[1], [0], [0], [1], [0, 0, 1, 1], [], []>} : vector<16x32xf32>, vector<32x32xf32>, vector<16x32xf32> -> vector<16x32xf32>
    %c0_74 = arith.constant 0 : index
    %c0_75 = arith.constant 0 : index
    %c0_76 = arith.constant 0 : index
    %153 = vector.load %arg13[%c0_74, %c0_75, %c0_76] : memref<1x1x32xf32, #tpu.memory_space<vmem>>, vector<1x1x32xf32>
    %154 = vector.shape_cast %153 : vector<1x1x32xf32> to vector<1x32xf32>
    %155 = vector.broadcast %154 : vector<1x32xf32> to vector<16x32xf32>
    %156 = arith.addf %152, %155 : vector<16x32xf32>
    %157 = arith.addf %103, %156 : vector<16x32xf32>
    %c0_77 = arith.constant 0 : index
    %c0_78 = arith.constant 0 : index
    %158 = vector.load %arg17[%c0_77, %c0_78] : memref<16x32xf32, #tpu.memory_space<vmem>>, vector<16x32xf32>
    tpu.vector_store %arg17[%c0_77, %c0_78], %157 {strides = array<i32>} : memref<16x32xf32, #tpu.memory_space<vmem>>, vector<16x32xf32>,
    %c1_i32 = arith.constant 1 : i32
    %159 = arith.cmpi eq, %arg1, %c1_i32 : i32
    %160 = arith.extui %159 : i1 to i32
    %c0_i32_79 = arith.constant 0 : i32
    %161 = arith.cmpi ne, %160, %c0_i32_79 : i32
    scf.if %161 {
      %c0_80 = arith.constant 0 : index
      %c0_81 = arith.constant 0 : index
      %162 = vector.load %arg14[%c0_80, %c0_81] : memref<1x32xf32, #tpu.memory_space<vmem>>, vector<1x32xf32>
      %c0_82 = arith.constant 0 : index
      %c0_83 = arith.constant 0 : index
      %163 = vector.load %arg15[%c0_82, %c0_83] : memref<1x32xf32, #tpu.memory_space<vmem>>, vector<1x32xf32>
      %cst_84 = arith.constant dense<0.000000e+00> : vector<16xf32>
      %164 = vector.multi_reduction <add>, %157, %cst_84 [1] : vector<16x32xf32> to vector<16xf32>
      %165 = vector.shape_cast %164 : vector<16xf32> to vector<16x1xf32>
      %cst_85 = arith.constant 3.200000e+01 : f32
      %166 = vector.broadcast %cst_85 : f32 to vector<16x1xf32>
      %167 = arith.divf %165, %166 : vector<16x1xf32>
      %168 = vector.broadcast %167 : vector<16x1xf32> to vector<16x32xf32>
      %169 = arith.subf %157, %168 : vector<16x32xf32>
      %170 = arith.mulf %169, %169 : vector<16x32xf32>
      %cst_86 = arith.constant dense<0.000000e+00> : vector<16xf32>
      %171 = vector.multi_reduction <add>, %170, %cst_86 [1] : vector<16x32xf32> to vector<16xf32>
      %172 = vector.shape_cast %171 : vector<16xf32> to vector<16x1xf32>
      %cst_87 = arith.constant 3.200000e+01 : f32
      %173 = vector.broadcast %cst_87 : f32 to vector<16x1xf32>
      %174 = arith.divf %172, %173 : vector<16x1xf32>
      %175 = vector.broadcast %167 : vector<16x1xf32> to vector<16x32xf32>
      %176 = arith.subf %157, %175 : vector<16x32xf32>
      %cst_88 = arith.constant 9.99999974E-6 : f32
      %177 = vector.broadcast %cst_88 : f32 to vector<16x1xf32>
      %178 = arith.addf %174, %177 : vector<16x1xf32>
      %179 = math.rsqrt %178 : vector<16x1xf32>
      %180 = vector.broadcast %179 : vector<16x1xf32> to vector<16x32xf32>
      %181 = arith.mulf %176, %180 : vector<16x32xf32>
      %182 = vector.broadcast %162 : vector<1x32xf32> to vector<16x32xf32>
      %183 = arith.mulf %181, %182 : vector<16x32xf32>
      %184 = vector.broadcast %163 : vector<1x32xf32> to vector<16x32xf32>
      %185 = arith.addf %183, %184 : vector<16x32xf32>
      %c0_89 = arith.constant 0 : index
      %c0_90 = arith.constant 0 : index
      %c0_91 = arith.constant 0 : index
      %186 = vector.load %arg16[%c0_89, %c0_90, %c0_91] : memref<1x16x32xf32, #tpu.memory_space<vmem>>, vector<1x16x32xf32>
      %187 = vector.shape_cast %186 : vector<1x16x32xf32> to vector<16x32xf32>
      %188 = vector.shape_cast %185 : vector<16x32xf32> to vector<1x16x32xf32>
      tpu.vector_store %arg16[%c0_89, %c0_90, %c0_91], %188 {strides = array<i32>} : memref<1x16x32xf32, #tpu.memory_space<vmem>>, vector<1x16x32xf32>,
    } else {
    }
    return
  }
  func.func @transform_0(%arg0: i32, %arg1: i32) -> (i32, i32, i32) {
    %c0_i32 = arith.constant 0 : i32
    %c0_i32_0 = arith.constant 0 : i32
    %c0_i32_1 = arith.constant 0 : i32
    return %arg0, %c0_i32, %c0_i32_0 : i32, i32, i32
  }
  func.func @transform_1(%arg0: i32, %arg1: i32) -> (i32, i32, i32) {
    %c0_i32 = arith.constant 0 : i32
    %c0_i32_0 = arith.constant 0 : i32
    %c0_i32_1 = arith.constant 0 : i32
    return %arg1, %c0_i32, %c0_i32_0 : i32, i32, i32
  }
  func.func @transform_2(%arg0: i32, %arg1: i32) -> (i32, i32, i32) {
    %c0_i32 = arith.constant 0 : i32
    %c0_i32_0 = arith.constant 0 : i32
    %c0_i32_1 = arith.constant 0 : i32
    return %arg1, %c0_i32, %c0_i32_0 : i32, i32, i32
  }
  func.func @transform_3(%arg0: i32, %arg1: i32) -> (i32, i32, i32) {
    %c0_i32 = arith.constant 0 : i32
    %c0_i32_0 = arith.constant 0 : i32
    %c0_i32_1 = arith.constant 0 : i32
    return %arg1, %c0_i32, %c0_i32_0 : i32, i32, i32
  }
  func.func @transform_4(%arg0: i32, %arg1: i32) -> (i32, i32, i32) {
    %c0_i32 = arith.constant 0 : i32
    %c0_i32_0 = arith.constant 0 : i32
    %c0_i32_1 = arith.constant 0 : i32
    return %arg1, %c0_i32, %c0_i32_0 : i32, i32, i32
  }
  func.func @transform_5(%arg0: i32, %arg1: i32) -> (i32, i32, i32) {
    %c0_i32 = arith.constant 0 : i32
    %c0_i32_0 = arith.constant 0 : i32
    %c0_i32_1 = arith.constant 0 : i32
    return %arg1, %c0_i32, %c0_i32_0 : i32, i32, i32
  }
  func.func @transform_6(%arg0: i32, %arg1: i32) -> (i32, i32, i32) {
    %c0_i32 = arith.constant 0 : i32
    %c0_i32_0 = arith.constant 0 : i32
    %c0_i32_1 = arith.constant 0 : i32
    return %arg1, %c0_i32, %c0_i32_0 : i32, i32, i32
  }
  func.func @transform_7(%arg0: i32, %arg1: i32) -> (i32, i32, i32) {
    %c0_i32 = arith.constant 0 : i32
    %c0_i32_0 = arith.constant 0 : i32
    %c0_i32_1 = arith.constant 0 : i32
    return %arg1, %c0_i32, %c0_i32_0 : i32, i32, i32
  }
  func.func @transform_8(%arg0: i32, %arg1: i32) -> (i32, i32, i32) {
    %c0_i32 = arith.constant 0 : i32
    %c0_i32_0 = arith.constant 0 : i32
    %c0_i32_1 = arith.constant 0 : i32
    return %arg1, %c0_i32, %c0_i32_0 : i32, i32, i32
  }
  func.func @transform_9(%arg0: i32, %arg1: i32) -> (i32, i32, i32) {
    %c0_i32 = arith.constant 0 : i32
    %c0_i32_0 = arith.constant 0 : i32
    %c0_i32_1 = arith.constant 0 : i32
    return %arg1, %c0_i32, %c0_i32_0 : i32, i32, i32
  }
  func.func @transform_10(%arg0: i32, %arg1: i32) -> (i32, i32, i32) {
    %c0_i32 = arith.constant 0 : i32
    %c0_i32_0 = arith.constant 0 : i32
    %c0_i32_1 = arith.constant 0 : i32
    return %arg1, %c0_i32, %c0_i32_0 : i32, i32, i32
  }
  func.func @transform_11(%arg0: i32, %arg1: i32) -> (i32, i32, i32) {
    %c0_i32 = arith.constant 0 : i32
    %c0_i32_0 = arith.constant 0 : i32
    %c0_i32_1 = arith.constant 0 : i32
    return %arg1, %c0_i32, %c0_i32_0 : i32, i32, i32
  }
  func.func @transform_12(%arg0: i32, %arg1: i32) -> (i32, i32) {
    %c0_i32 = arith.constant 0 : i32
    %c0_i32_0 = arith.constant 0 : i32
    %c0_i32_1 = arith.constant 0 : i32
    return %c0_i32, %c0_i32_0 : i32, i32
  }
  func.func @transform_13(%arg0: i32, %arg1: i32) -> (i32, i32) {
    %c0_i32 = arith.constant 0 : i32
    %c0_i32_0 = arith.constant 0 : i32
    %c0_i32_1 = arith.constant 0 : i32
    return %c0_i32, %c0_i32_0 : i32, i32
  }
  func.func @transform_14(%arg0: i32, %arg1: i32) -> (i32, i32, i32) {
    %c0_i32 = arith.constant 0 : i32
    %c0_i32_0 = arith.constant 0 : i32
    %c0_i32_1 = arith.constant 0 : i32
    return %arg0, %c0_i32, %c0_i32_0 : i32, i32, i32
  }
}

</mosaic_0001>

<llo_original>
// kernel: tpu_custom_call.1
$region0: #{tpu_custom_call.1}
  #allocation0 [shape = 'u32[]', space=smem, size = 0x4, offset = 0x4, fixed_abs, tag = 'smem constant byte address 0x4 - core index']
  #allocation1 [shape = 'u32[72,128]{1,0:T(1,128)}', space=vmem, size = 0x9000, scoped, tag = 'internal scratch']
  #allocation2 [shape = 'f32[16,32]{1,0:T(8,128)}', space=vmem, size = 0x2000, scoped, tag = 'scratch operand']
  #allocation3 [shape = 'f32[16,32]{1,0:T(8,128)}', space=vmem, size = 0x2000, scoped, tag = 'scratch operand']
  %s0 = inlined_call_operand.hbm [shape: f32[2,16,32], index: 0, kind: input, shape index: {}]
  %s1 = inlined_call_operand.hbm [shape: f32[2,32,96], index: 1, kind: input, shape index: {}]
  %s2 = inlined_call_operand.hbm [shape: f32[2,32,32], index: 2, kind: input, shape index: {}]
  %s3 = inlined_call_operand.vmem [shape: f32[2,1,32], index: 3, kind: input, shape index: {}]
  %s4 = inlined_call_operand.hbm [shape: f32[2,1,32], index: 4, kind: input, shape index: {}]
  %s5 = inlined_call_operand.vmem [shape: f32[2,1,32], index: 5, kind: input, shape index: {}]
  %s6 = inlined_call_operand.hbm [shape: f32[2,1,32], index: 6, kind: input, shape index: {}]
  %s7 = inlined_call_operand.vmem [shape: f32[2,1,32], index: 7, kind: input, shape index: {}]
  %s8 = inlined_call_operand.hbm [shape: f32[2,32,32], index: 8, kind: input, shape index: {}]
  %s9 = inlined_call_operand.vmem [shape: f32[2,1,32], index: 9, kind: input, shape index: {}]
  %s10 = inlined_call_operand.hbm [shape: f32[2,32,32], index: 10, kind: input, shape index: {}]
  %s11 = inlined_call_operand.vmem [shape: f32[2,1,32], index: 11, kind: input, shape index: {}]
  %s12 = inlined_call_operand.vmem [shape: f32[1,32], index: 12, kind: input, shape index: {}]
  %s13 = inlined_call_operand.vmem [shape: f32[1,32], index: 13, kind: input, shape index: {}]
  %s14 = inlined_call_operand.hbm [shape: f32[2,16,32], index: 14, kind: output, shape index: {}]
  %s15 = sld [smem:[#allocation0]]
  $region125: #{tpu_custom_call.1} parent=0
    _
  %s17 = ssub.s32 1, %s15
  %s18 = scalar_select 0, %s17, %s15
  $region1: #{tpu_custom_call.1} parent=0
    #allocation4 [shape = 'u8[16384]{0}', space=vmem, size = 0x4000, scoped, tag = 'input window, operand 0']
    #allocation5 [shape = 's32[2]{0}', space=sflag, size = 0x8, scoped, tag = 'scoped memory for tpu_custom_call.1']
    #allocation6 [shape = 's32[2]{0}', space=sflag, size = 0x8, scoped, tag = 'scoped memory for tpu_custom_call.1']
    #allocation7 [shape = 'u8[32768]{0}', space=vmem, size = 0x8000, scoped, tag = 'input window, operand 1']
    #allocation8 [shape = 's32[2]{0}', space=sflag, size = 0x8, scoped, tag = 'scoped memory for tpu_custom_call.1']
    #allocation9 [shape = 'u8[32768]{0}', space=vmem, size = 0x8000, scoped, tag = 'input window, operand 2']
    #allocation10 [shape = 'u8[1024]{0}', space=vmem, size = 0x400, scoped, tag = 'input window, operand 4']
    #allocation11 [shape = 's32[2]{0}', space=sflag, size = 0x8, scoped, tag = 'scoped memory for tpu_custom_call.1']
    #allocation12 [shape = 'u8[1024]{0}', space=vmem, size = 0x400, scoped, tag = 'input window, operand 6']
    #allocation13 [shape = 'u8[32768]{0}', space=vmem, size = 0x8000, scoped, tag = 'input window, operand 8']
    #allocation14 [shape = 's32[2]{0}', space=sflag, size = 0x8, scoped, tag = 'scoped memory for tpu_custom_call.1']
    #allocation15 [shape = 'u8[32768]{0}', space=vmem, size = 0x8000, scoped, tag = 'input window, operand 10']
    #allocation16 [shape = 'u8[16384]{0}', space=vmem, size = 0x4000, scoped, tag = 'output window, operand 0']
    %19 = vsyncpa [#allocation5], 0
    %s20 = scalar_lea.sflag [#allocation5], 1
    %21 = vsyncpa %s20, 0
    %22 = vsyncpa [#allocation8], 0
    %s23 = scalar_lea.sflag [#allocation8], 1
    %24 = vsyncpa %s23, 0
    %25 = vsyncpa [#allocation11], 0
    %s26 = scalar_lea.sflag [#allocation11], 1
    %27 = vsyncpa %s26, 0
    %28 = vsyncpa [#allocation14], 0
    %s29 = scalar_lea.sflag [#allocation14], 1
    %30 = vsyncpa %s29, 0
    %31 = vsyncpa [#allocation6], 0
    %s32 = scalar_lea.sflag [#allocation6], 1
    %33 = vsyncpa %s32, 0
    loop: start=0, step=1, limit=6
    $region2: #{tpu_custom_call.1} parent=1 // loop_pre_header
      _
    $region3: #{tpu_custom_call.1} parent=1 // loop_header
      %s35 = sphi 0, %s39
      %p36 = scmp.ge.s32.totalorder %s35, 6
      %s42 = sphi 0, %s54
      %s43 = sphi 0, %s50
      %s44 = sphi 0, %s42
      %s45 = sphi 0, %s43
      %s46 = sphi 0, %s44
      %s47 = sphi 0, %s45
      %s57 = sphi 0, %s59
      %s60 = sphi 0, %s57
      %s61 = sphi 0, %s60
      %s77 = sphi 0, %s61
      %s83 = sphi 0, %s85
      %s86 = sphi 0, %s83
      %s87 = sphi 0, %s86
      %s103 = sphi 0, %s87
      %s109 = sphi 0, %s111
      %s112 = sphi 0, %s109
      %s113 = sphi 0, %s112
      %s129 = sphi 0, %s113
      %s135 = sphi 0, %s137
      %s138 = sphi 0, %s135
      %s139 = sphi 0, %s138
      %s155 = sphi 0, %s139
      %s161 = sphi 0, %s163
      %s164 = sphi 0, %s161
      %s165 = sphi 0, %s164
      %s181 = sphi 0, %s165
      %s187 = sphi 0, %s189
      %s190 = sphi 0, %s187
      %s191 = sphi 0, %s190
      %s207 = sphi 0, %s191
      %s213 = sphi 0, %s215
      %s216 = sphi 0, %s213
      %s217 = sphi 0, %s216
      %s233 = sphi 0, %s217
      %s239 = sphi 0, %s241
      %s242 = sphi 0, %s239
      %s243 = sphi 0, %s242
      %s259 = sphi 0, %s243
      %s265 = sphi 0, %s267
      %s268 = sphi 0, %s265
      %s269 = sphi 0, %s268
      %s285 = sphi 0, %s269
      %s291 = sphi 0, %s293
      %s294 = sphi 0, %s291
      %s295 = sphi 0, %s294
      %s311 = sphi 0, %s295
      %s317 = sphi 0, %s319
      %s320 = sphi 0, %s317
      %s321 = sphi 0, %s320
      %s337 = sphi 0, %s321
      %s343 = sphi 0, %s345
      %s346 = sphi 0, %s343
      %s347 = sphi 0, %s346
      %s363 = sphi 0, %s347
      %s367 = sphi 0, %s367
      %s369 = sphi 0, %s367
      %s370 = sphi 0, %s369
      %s384 = sphi 0, %s370
      %s388 = sphi 0, %s388
      %s390 = sphi 0, %s388
      %s391 = sphi 0, %s390
      %s405 = sphi 0, %s391
      %s411 = sphi 0, %s413
      %s414 = sphi 0, %s411
      %s415 = sphi 0, %s414
      %s431 = sphi 0, %s415
    $region4: #{tpu_custom_call.1} parent=1 // loop_header_branch
      %38 = sbr.rel (%p36) target = $region8
    $region5: #{tpu_custom_call.1} parent=1 // loop_body
      %s40 = ssub.s32 %s35, 1
      %s41 = ssub.s32 %s35, 2
      %s48 = sadd.s32 1, %s43
      %p49 = scmp.ge.s32.totalorder %s48, 2
      %s50 = scalar_select %p49, 0, %s48
      %s51 = sadd.s32 1, %s42
      %s52 = scalar_select %p49, %s51, %s42
      %p53 = scmp.ge.s32.totalorder %s52, 2
      %s54 = scalar_select %p53, 0, %s52
      %s55 = ssub.s32 %s42, %s54
      %p56 = scmp.eq.s32.totalorder %s55, 0
      %s58 = sadd.s32 %s57, 1
      %s59 = scalar_select %p56, %s57, %s58
      %p62 = pneg %p56
      %p63 = scmp.eq.s32.totalorder %s35, 3
      %p64 = por %p62, %p63
      %p65 = scmp.ne.s32.totalorder %s57, %s60
      %p66 = scmp.eq.s32.totalorder %s35, 0
      %p67 = por %p65, %p66
      %p68 = scmp.ne.s32.totalorder %s57, %s60
      %p69 = scmp.eq.s32.totalorder %s40, 3
      %p70 = por %p68, %p69
      %p71 = scmp.ne.s32.totalorder %s60, %s61
      %p72 = scmp.eq.s32.totalorder %s40, 0
      %p73 = por %p71, %p72
      %p74 = scmp.ne.s32.totalorder %s60, %s61
      %p75 = scmp.eq.s32.totalorder %s41, 3
      %p76 = por %p74, %p75
      %p78 = scmp.ne.s32.totalorder %s61, %s77
      %p79 = scmp.eq.s32.totalorder %s41, 0
      %p80 = por %p78, %p79
      %s81 = ssub.s32 %s43, %s50
      %p82 = scmp.eq.s32.totalorder %s81, 0
      %s84 = sadd.s32 %s83, 1
      %s85 = scalar_select %p82, %s83, %s84
      %p88 = pneg %p82
      %p89 = scmp.eq.s32.totalorder %s35, 3
      %p90 = por %p88, %p89
      %p91 = scmp.ne.s32.totalorder %s83, %s86
      %p92 = scmp.eq.s32.totalorder %s35, 0
      %p93 = por %p91, %p92
      %p94 = scmp.ne.s32.totalorder %s83, %s86
      %p95 = scmp.eq.s32.totalorder %s40, 3
      %p96 = por %p94, %p95
      %p97 = scmp.ne.s32.totalorder %s86, %s87
      %p98 = scmp.eq.s32.totalorder %s40, 0
      %p99 = por %p97, %p98
      %p100 = scmp.ne.s32.totalorder %s86, %s87
      %p101 = scmp.eq.s32.totalorder %s41, 3
      %p102 = por %p100, %p101
      %p104 = scmp.ne.s32.totalorder %s87, %s103
      %p105 = scmp.eq.s32.totalorder %s41, 0
      %p106 = por %p104, %p105
      %s107 = ssub.s32 %s43, %s50
      %p108 = scmp.eq.s32.totalorder %s107, 0
      %s110 = sadd.s32 %s109, 1
      %s111 = scalar_select %p108, %s109, %s110
      %p114 = pneg %p108
      %p115 = scmp.eq.s32.totalorder %s35, 3
      %p116 = por %p114, %p115
      %p117 = scmp.ne.s32.totalorder %s109, %s112
      %p118 = scmp.eq.s32.totalorder %s35, 0
      %p119 = por %p117, %p118
      %p120 = scmp.ne.s32.totalorder %s109, %s112
      %p121 = scmp.eq.s32.totalorder %s40, 3
      %p122 = por %p120, %p121
      %p123 = scmp.ne.s32.totalorder %s112, %s113
      %p124 = scmp.eq.s32.totalorder %s40, 0
      %p125 = por %p123, %p124
      %p126 = scmp.ne.s32.totalorder %s112, %s113
      %p127 = scmp.eq.s32.totalorder %s41, 3
      %p128 = por %p126, %p127
      %p130 = scmp.ne.s32.totalorder %s113, %s129
      %p131 = scmp.eq.s32.totalorder %s41, 0
      %p132 = por %p130, %p131
      %s133 = ssub.s32 %s43, %s50
      %p134 = scmp.eq.s32.totalorder %s133, 0
      %s136 = sadd.s32 %s135, 1
      %s137 = scalar_select %p134, %s135, %s136
      %p140 = pneg %p134
      %p141 = scmp.eq.s32.totalorder %s35, 3
      %p142 = por %p140, %p141
      %p143 = scmp.ne.s32.totalorder %s135, %s138
      %p144 = scmp.eq.s32.totalorder %s35, 0
      %p145 = por %p143, %p144
      %p146 = scmp.ne.s32.totalorder %s135, %s138
      %p147 = scmp.eq.s32.totalorder %s40, 3
      %p148 = por %p146, %p147
      %p149 = scmp.ne.s32.totalorder %s138, %s139
      %p150 = scmp.eq.s32.totalorder %s40, 0
      %p151 = por %p149, %p150
      %p152 = scmp.ne.s32.totalorder %s138, %s139
      %p153 = scmp.eq.s32.totalorder %s41, 3
      %p154 = por %p152, %p153
      %p156 = scmp.ne.s32.totalorder %s139, %s155
      %p157 = scmp.eq.s32.totalorder %s41, 0
      %p158 = por %p156, %p157
      %s159 = ssub.s32 %s43, %s50
      %p160 = scmp.eq.s32.totalorder %s159, 0
      %s162 = sadd.s32 %s161, 1
      %s163 = scalar_select %p160, %s161, %s162
      %p166 = pneg %p160
      %p167 = scmp.eq.s32.totalorder %s35, 3
      %p168 = por %p166, %p167
      %p169 = scmp.ne.s32.totalorder %s161, %s164
      %p170 = scmp.eq.s32.totalorder %s35, 0
      %p171 = por %p169, %p170
      %p172 = scmp.ne.s32.totalorder %s161, %s164
      %p173 = scmp.eq.s32.totalorder %s40, 3
      %p174 = por %p172, %p173
      %p175 = scmp.ne.s32.totalorder %s164, %s165
      %p176 = scmp.eq.s32.totalorder %s40, 0
      %p177 = por %p175, %p176
      %p178 = scmp.ne.s32.totalorder %s164, %s165
      %p179 = scmp.eq.s32.totalorder %s41, 3
      %p180 = por %p178, %p179
      %p182 = scmp.ne.s32.totalorder %s165, %s181
      %p183 = scmp.eq.s32.totalorder %s41, 0
      %p184 = por %p182, %p183
      %s185 = ssub.s32 %s43, %s50
      %p186 = scmp.eq.s32.totalorder %s185, 0
      %s188 = sadd.s32 %s187, 1
      %s189 = scalar_select %p186, %s187, %s188
      %p192 = pneg %p186
      %p193 = scmp.eq.s32.totalorder %s35, 3
      %p194 = por %p192, %p193
      %p195 = scmp.ne.s32.totalorder %s187, %s190
      %p196 = scmp.eq.s32.totalorder %s35, 0
      %p197 = por %p195, %p196
      %p198 = scmp.ne.s32.totalorder %s187, %s190
      %p199 = scmp.eq.s32.totalorder %s40, 3
      %p200 = por %p198, %p199
      %p201 = scmp.ne.s32.totalorder %s190, %s191
      %p202 = scmp.eq.s32.totalorder %s40, 0
      %p203 = por %p201, %p202
      %p204 = scmp.ne.s32.totalorder %s190, %s191
      %p205 = scmp.eq.s32.totalorder %s41, 3
      %p206 = por %p204, %p205
      %p208 = scmp.ne.s32.totalorder %s191, %s207
      %p209 = scmp.eq.s32.totalorder %s41, 0
      %p210 = por %p208, %p209
      %s211 = ssub.s32 %s43, %s50
      %p212 = scmp.eq.s32.totalorder %s211, 0
      %s214 = sadd.s32 %s213, 1
      %s215 = scalar_select %p212, %s213, %s214
      %p218 = pneg %p212
      %p219 = scmp.eq.s32.totalorder %s35, 3
      %p220 = por %p218, %p219
      %p221 = scmp.ne.s32.totalorder %s213, %s216
      %p222 = scmp.eq.s32.totalorder %s35, 0
      %p223 = por %p221, %p222
      %p224 = scmp.ne.s32.totalorder %s213, %s216
      %p225 = scmp.eq.s32.totalorder %s40, 3
      %p226 = por %p224, %p225
      %p227 = scmp.ne.s32.totalorder %s216, %s217
      %p228 = scmp.eq.s32.totalorder %s40, 0
      %p229 = por %p227, %p228
      %p230 = scmp.ne.s32.totalorder %s216, %s217
      %p231 = scmp.eq.s32.totalorder %s41, 3
      %p232 = por %p230, %p231
      %p234 = scmp.ne.s32.totalorder %s217, %s233
      %p235 = scmp.eq.s32.totalorder %s41, 0
      %p236 = por %p234, %p235
      %s237 = ssub.s32 %s43, %s50
      %p238 = scmp.eq.s32.totalorder %s237, 0
      %s240 = sadd.s32 %s239, 1
      %s241 = scalar_select %p238, %s239, %s240
      %p244 = pneg %p238
      %p245 = scmp.eq.s32.totalorder %s35, 3
      %p246 = por %p244, %p245
      %p247 = scmp.ne.s32.totalorder %s239, %s242
      %p248 = scmp.eq.s32.totalorder %s35, 0
      %p249 = por %p247, %p248
      %p250 = scmp.ne.s32.totalorder %s239, %s242
      %p251 = scmp.eq.s32.totalorder %s40, 3
      %p252 = por %p250, %p251
      %p253 = scmp.ne.s32.totalorder %s242, %s243
      %p254 = scmp.eq.s32.totalorder %s40, 0
      %p255 = por %p253, %p254
      %p256 = scmp.ne.s32.totalorder %s242, %s243
      %p257 = scmp.eq.s32.totalorder %s41, 3
      %p258 = por %p256, %p257
      %p260 = scmp.ne.s32.totalorder %s243, %s259
      %p261 = scmp.eq.s32.totalorder %s41, 0
      %p262 = por %p260, %p261
      %s263 = ssub.s32 %s43, %s50
      %p264 = scmp.eq.s32.totalorder %s263, 0
      %s266 = sadd.s32 %s265, 1
      %s267 = scalar_select %p264, %s265, %s266
      %p270 = pneg %p264
      %p271 = scmp.eq.s32.totalorder %s35, 3
      %p272 = por %p270, %p271
      %p273 = scmp.ne.s32.totalorder %s265, %s268
      %p274 = scmp.eq.s32.totalorder %s35, 0
      %p275 = por %p273, %p274
      %p276 = scmp.ne.s32.totalorder %s265, %s268
      %p277 = scmp.eq.s32.totalorder %s40, 3
      %p278 = por %p276, %p277
      %p279 = scmp.ne.s32.totalorder %s268, %s269
      %p280 = scmp.eq.s32.totalorder %s40, 0
      %p281 = por %p279, %p280
      %p282 = scmp.ne.s32.totalorder %s268, %s269
      %p283 = scmp.eq.s32.totalorder %s41, 3
      %p284 = por %p282, %p283
      %p286 = scmp.ne.s32.totalorder %s269, %s285
      %p287 = scmp.eq.s32.totalorder %s41, 0
      %p288 = por %p286, %p287
      %s289 = ssub.s32 %s43, %s50
      %p290 = scmp.eq.s32.totalorder %s289, 0
      %s292 = sadd.s32 %s291, 1
      %s293 = scalar_select %p290, %s291, %s292
      %p296 = pneg %p290
      %p297 = scmp.eq.s32.totalorder %s35, 3
      %p298 = por %p296, %p297
      %p299 = scmp.ne.s32.totalorder %s291, %s294
      %p300 = scmp.eq.s32.totalorder %s35, 0
      %p301 = por %p299, %p300
      %p302 = scmp.ne.s32.totalorder %s291, %s294
      %p303 = scmp.eq.s32.totalorder %s40, 3
      %p304 = por %p302, %p303
      %p305 = scmp.ne.s32.totalorder %s294, %s295
      %p306 = scmp.eq.s32.totalorder %s40, 0
      %p307 = por %p305, %p306
      %p308 = scmp.ne.s32.totalorder %s294, %s295
      %p309 = scmp.eq.s32.totalorder %s41, 3
      %p310 = por %p308, %p309
      %p312 = scmp.ne.s32.totalorder %s295, %s311
      %p313 = scmp.eq.s32.totalorder %s41, 0
      %p314 = por %p312, %p313
      %s315 = ssub.s32 %s43, %s50
      %p316 = scmp.eq.s32.totalorder %s315, 0
      %s318 = sadd.s32 %s317, 1
      %s319 = scalar_select %p316, %s317, %s318
      %p322 = pneg %p316
      %p323 = scmp.eq.s32.totalorder %s35, 3
      %p324 = por %p322, %p323
      %p325 = scmp.ne.s32.totalorder %s317, %s320
      %p326 = scmp.eq.s32.totalorder %s35, 0
      %p327 = por %p325, %p326
      %p328 = scmp.ne.s32.totalorder %s317, %s320
      %p329 = scmp.eq.s32.totalorder %s40, 3
      %p330 = por %p328, %p329
      %p331 = scmp.ne.s32.totalorder %s320, %s321
      %p332 = scmp.eq.s32.totalorder %s40, 0
      %p333 = por %p331, %p332
      %p334 = scmp.ne.s32.totalorder %s320, %s321
      %p335 = scmp.eq.s32.totalorder %s41, 3
      %p336 = por %p334, %p335
      %p338 = scmp.ne.s32.totalorder %s321, %s337
      %p339 = scmp.eq.s32.totalorder %s41, 0
      %p340 = por %p338, %p339
      %s341 = ssub.s32 %s43, %s50
      %p342 = scmp.eq.s32.totalorder %s341, 0
      %s344 = sadd.s32 %s343, 1
      %s345 = scalar_select %p342, %s343, %s344
      %p348 = pneg %p342
      %p349 = scmp.eq.s32.totalorder %s35, 3
      %p350 = por %p348, %p349
      %p351 = scmp.ne.s32.totalorder %s343, %s346
      %p352 = scmp.eq.s32.totalorder %s35, 0
      %p353 = por %p351, %p352
      %p354 = scmp.ne.s32.totalorder %s343, %s346
      %p355 = scmp.eq.s32.totalorder %s40, 3
      %p356 = por %p354, %p355
      %p357 = scmp.ne.s32.totalorder %s346, %s347
      %p358 = scmp.eq.s32.totalorder %s40, 0
      %p359 = por %p357, %p358
      %p360 = scmp.ne.s32.totalorder %s346, %s347
      %p361 = scmp.eq.s32.totalorder %s41, 3
      %p362 = por %p360, %p361
      %p364 = scmp.ne.s32.totalorder %s347, %s363
      %p365 = scmp.eq.s32.totalorder %s41, 0
      %p366 = por %p364, %p365
      %s368 = sadd.s32 %s367, 1
      %p371 = scmp.eq.s32.totalorder %s35, 3
      %p372 = scmp.ne.s32.totalorder %s367, %s369
      %p373 = scmp.eq.s32.totalorder %s35, 0
      %p374 = por %p372, %p373
      %p375 = scmp.ne.s32.totalorder %s367, %s369
      %p376 = scmp.eq.s32.totalorder %s40, 3
      %p377 = por %p375, %p376
      %p378 = scmp.ne.s32.totalorder %s369, %s370
      %p379 = scmp.eq.s32.totalorder %s40, 0
      %p380 = por %p378, %p379
      %p381 = scmp.ne.s32.totalorder %s369, %s370
      %p382 = scmp.eq.s32.totalorder %s41, 3
      %p383 = por %p381, %p382
      %p385 = scmp.ne.s32.totalorder %s370, %s384
      %p386 = scmp.eq.s32.totalorder %s41, 0
      %p387 = por %p385, %p386
      %s389 = sadd.s32 %s388, 1
      %p392 = scmp.eq.s32.totalorder %s35, 3
      %p393 = scmp.ne.s32.totalorder %s388, %s390
      %p394 = scmp.eq.s32.totalorder %s35, 0
      %p395 = por %p393, %p394
      %p396 = scmp.ne.s32.totalorder %s388, %s390
      %p397 = scmp.eq.s32.totalorder %s40, 3
      %p398 = por %p396, %p397
      %p399 = scmp.ne.s32.totalorder %s390, %s391
      %p400 = scmp.eq.s32.totalorder %s40, 0
      %p401 = por %p399, %p400
      %p402 = scmp.ne.s32.totalorder %s390, %s391
      %p403 = scmp.eq.s32.totalorder %s41, 3
      %p404 = por %p402, %p403
      %p406 = scmp.ne.s32.totalorder %s391, %s405
      %p407 = scmp.eq.s32.totalorder %s41, 0
      %p408 = por %p406, %p407
      %s409 = ssub.s32 %s42, %s54
      %p410 = scmp.eq.s32.totalorder %s409, 0
      %s412 = sadd.s32 %s411, 1
      %s413 = scalar_select %p410, %s411, %s412
      %p416 = pneg %p410
      %p417 = scmp.eq.s32.totalorder %s35, 3
      %p418 = por %p416, %p417
      %p419 = scmp.ne.s32.totalorder %s411, %s414
      %p420 = scmp.eq.s32.totalorder %s35, 0
      %p421 = por %p419, %p420
      %p422 = scmp.ne.s32.totalorder %s411, %s414
      %p423 = scmp.eq.s32.totalorder %s40, 3
      %p424 = por %p422, %p423
      %p425 = scmp.ne.s32.totalorder %s414, %s415
      %p426 = scmp.eq.s32.totalorder %s40, 0
      %p427 = por %p425, %p426
      %p428 = scmp.ne.s32.totalorder %s414, %s415
      %p429 = scmp.eq.s32.totalorder %s41, 3
      %p430 = por %p428, %p429
      %p432 = scmp.ne.s32.totalorder %s415, %s431
      %p433 = scmp.eq.s32.totalorder %s41, 0
      %p434 = por %p432, %p433
      %p435 = scmp.le.s32.totalorder 1, %s35
      %p436 = scmp.lt.s32.totalorder %s35, 5
      %p437 = pnand %p435, %p436
      %p438 = pneg %p437
      // Predicated region
      $region9: #{tpu_custom_call.1} parent=5 // pred_check
        _
      $region10: #{tpu_custom_call.1} parent=5 // pred_check_branch
        %440 = sbr.rel (%p437) target = $region12
      $region11: #{tpu_custom_call.1} parent=5 // pred_region
        %s441 = ssub.s32 %s35, 1
        // Predicated region
        $region13: #{tpu_custom_call.1} parent=11 // pred_check
          %p442 = pneg %p380
        $region14: #{tpu_custom_call.1} parent=11 // pred_check_branch
          %444 = sbr.rel (%p442) target = $region16
        $region15: #{tpu_custom_call.1} parent=11 // pred_region
          _
        $region16: #{tpu_custom_call.1} parent=11 // pred_fallthru
          _
        // Predicated region
        $region17: #{tpu_custom_call.1} parent=11 // pred_check
          %p445 = pneg %p401
        $region18: #{tpu_custom_call.1} parent=11 // pred_check_branch
          %447 = sbr.rel (%p445) target = $region20
        $region19: #{tpu_custom_call.1} parent=11 // pred_region
          _
        $region20: #{tpu_custom_call.1} parent=11 // pred_fallthru
          _
      $region12: #{tpu_custom_call.1} parent=5 // pred_fallthru
        _
      %p448 = scmp.lt.s32.totalorder %s35, 4
      // Predicated region
      $region21: #{tpu_custom_call.1} parent=5 // pred_check
        %p449 = pneg %p448
      $region22: #{tpu_custom_call.1} parent=5 // pred_check_branch
        %451 = sbr.rel (%p449) target = $region24
      $region23: #{tpu_custom_call.1} parent=5 // pred_region
        // Predicated region
        $region25: #{tpu_custom_call.1} parent=23 // pred_check
          %p452 = pneg %p67
        $region26: #{tpu_custom_call.1} parent=23 // pred_check_branch
          %454 = sbr.rel (%p452) target = $region28
        $region27: #{tpu_custom_call.1} parent=23 // pred_region
          %s455 = sand.u32 %s57, 1
          %s456 = scalar_lea.sflag [#allocation5], %s455
          %s457 = sand.u32 %s57, 1
          %s458 = smul.addr %s457, 16
          %s459 = scalar_lea.vmem [#allocation4], %s458
          %461 = vsyncadd %s456, 0
          %s462 = smul.addr %s42, 2
          %s463 = smul.addr %s462, 8
          %s464 = scalar_lea.hbm %s0, %s463
          %s465 = sshll.u32 %s464, 4
          %s466 = int_to_ptr.hbm [resolvable:$true] %s465
          %s467 = sshll.u32 %s459, 4
          %s468 = int_to_ptr.vmem [resolvable:$true] %s467
          %473 = dma.hbm_to_vmem [thread:$0]  %s466, 256, %s468, %s456, 128, 128, 8
        $region28: #{tpu_custom_call.1} parent=23 // pred_fallthru
          _
        // Predicated region
        $region29: #{tpu_custom_call.1} parent=23 // pred_check
          %p474 = pneg %p93
        $region30: #{tpu_custom_call.1} parent=23 // pred_check_branch
          %476 = sbr.rel (%p474) target = $region32
        $region31: #{tpu_custom_call.1} parent=23 // pred_region
          %s477 = sand.u32 %s35, 1
          %s478 = scalar_lea.sflag [#allocation8], %s477
          %s479 = sand.u32 %s83, 1
          %s480 = smul.addr %s479, 32
          %s481 = scalar_lea.vmem [#allocation7], %s480
          %483 = vsyncadd %s478, 0
          %s484 = smul.addr %s43, 4
          %s485 = smul.addr %s484, 8
          %s486 = scalar_lea.hbm %s1, %s485
          %s487 = sshll.u32 %s486, 4
          %s488 = int_to_ptr.hbm [resolvable:$true] %s487
          %s489 = sshll.u32 %s481, 4
          %s490 = int_to_ptr.vmem [resolvable:$true] %s489
          %495 = dma.hbm_to_vmem [thread:$0]  %s488, 512, %s490, %s478, 128, 128, 8
        $region32: #{tpu_custom_call.1} parent=23 // pred_fallthru
          _
        // Predicated region
        $region33: #{tpu_custom_call.1} parent=23 // pred_check
          %p496 = pneg %p119
        $region34: #{tpu_custom_call.1} parent=23 // pred_check_branch
          %498 = sbr.rel (%p496) target = $region36
        $region35: #{tpu_custom_call.1} parent=23 // pred_region
          %s499 = sand.u32 %s35, 1
          %s500 = scalar_lea.sflag [#allocation8], %s499
          %s501 = sand.u32 %s109, 1
          %s502 = smul.addr %s501, 32
          %s503 = scalar_lea.vmem [#allocation9], %s502
          %505 = vsyncadd %s500, 0
          %s506 = smul.addr %s43, 4
          %s507 = smul.addr %s506, 8
          %s508 = scalar_lea.hbm %s2, %s507
          %s509 = sshll.u32 %s508, 4
          %s510 = int_to_ptr.hbm [resolvable:$true] %s509
          %s511 = sshll.u32 %s503, 4
          %s512 = int_to_ptr.vmem [resolvable:$true] %s511
          %517 = dma.hbm_to_vmem [thread:$0]  %s510, 512, %s512, %s500, 128, 128, 8
        $region36: #{tpu_custom_call.1} parent=23 // pred_fallthru
          _
        // Predicated region
        $region37: #{tpu_custom_call.1} parent=23 // pred_check
          %p518 = pneg %p145
        $region38: #{tpu_custom_call.1} parent=23 // pred_check_branch
          %520 = sbr.rel (%p518) target = $region40
        $region39: #{tpu_custom_call.1} parent=23 // pred_region
          %p521 = scmp.lt.s32.totalorder %s43, 1
          %s522 = scalar_select %p521, %s43, 1
          %s523 = scalar_lea.vmem %s3, %s522
        $region40: #{tpu_custom_call.1} parent=23 // pred_fallthru
          _
        // Predicated region
        $region41: #{tpu_custom_call.1} parent=23 // pred_check
          %p524 = pneg %p171
        $region42: #{tpu_custom_call.1} parent=23 // pred_check_branch
          %526 = sbr.rel (%p524) target = $region44
        $region43: #{tpu_custom_call.1} parent=23 // pred_region
          %s527 = sand.u32 %s35, 1
          %s528 = scalar_lea.sflag [#allocation11], %s527
          %s529 = sand.u32 %s161, 1
          %s530 = scalar_lea.vmem [#allocation10], %s529
          %532 = vsyncadd %s528, 0
          %s533 = scalar_lea.hbm %s4, %s43
          %s535 = sshll.u32 %s533, 4
          %s536 = int_to_ptr.hbm [resolvable:$true] %s535
          %s537 = sshll.u32 %s530, 4
          %s538 = int_to_ptr.vmem [resolvable:$true] %s537
          %540 = dma.hbm_to_vmem [thread:$0]  %s536, 16, %s538, %s528
        $region44: #{tpu_custom_call.1} parent=23 // pred_fallthru
          _
        // Predicated region
        $region45: #{tpu_custom_call.1} parent=23 // pred_check
          %p541 = pneg %p197
        $region46: #{tpu_custom_call.1} parent=23 // pred_check_branch
          %543 = sbr.rel (%p541) target = $region48
        $region47: #{tpu_custom_call.1} parent=23 // pred_region
          %p544 = scmp.lt.s32.totalorder %s43, 1
          %s545 = scalar_select %p544, %s43, 1
          %s546 = scalar_lea.vmem %s5, %s545
        $region48: #{tpu_custom_call.1} parent=23 // pred_fallthru
          _
        // Predicated region
        $region49: #{tpu_custom_call.1} parent=23 // pred_check
          %p547 = pneg %p223
        $region50: #{tpu_custom_call.1} parent=23 // pred_check_branch
          %549 = sbr.rel (%p547) target = $region52
        $region51: #{tpu_custom_call.1} parent=23 // pred_region
          %s550 = sand.u32 %s35, 1
          %s551 = scalar_lea.sflag [#allocation11], %s550
          %s552 = sand.u32 %s213, 1
          %s553 = scalar_lea.vmem [#allocation12], %s552
          %555 = vsyncadd %s551, 0
          %s556 = scalar_lea.hbm %s6, %s43
          %s558 = sshll.u32 %s556, 4
          %s559 = int_to_ptr.hbm [resolvable:$true] %s558
          %s560 = sshll.u32 %s553, 4
          %s561 = int_to_ptr.vmem [resolvable:$true] %s560
          %563 = dma.hbm_to_vmem [thread:$0]  %s559, 16, %s561, %s551
        $region52: #{tpu_custom_call.1} parent=23 // pred_fallthru
          _
        // Predicated region
        $region53: #{tpu_custom_call.1} parent=23 // pred_check
          %p564 = pneg %p249
        $region54: #{tpu_custom_call.1} parent=23 // pred_check_branch
          %566 = sbr.rel (%p564) target = $region56
        $region55: #{tpu_custom_call.1} parent=23 // pred_region
          %p567 = scmp.lt.s32.totalorder %s43, 1
          %s568 = scalar_select %p567, %s43, 1
          %s569 = scalar_lea.vmem %s7, %s568
        $region56: #{tpu_custom_call.1} parent=23 // pred_fallthru
          _
        // Predicated region
        $region57: #{tpu_custom_call.1} parent=23 // pred_check
          %p570 = pneg %p275
        $region58: #{tpu_custom_call.1} parent=23 // pred_check_branch
          %572 = sbr.rel (%p570) target = $region60
        $region59: #{tpu_custom_call.1} parent=23 // pred_region
          %s573 = sand.u32 %s35, 1
          %s574 = scalar_lea.sflag [#allocation14], %s573
          %s575 = sand.u32 %s265, 1
          %s576 = smul.addr %s575, 32
          %s577 = scalar_lea.vmem [#allocation13], %s576
          %579 = vsyncadd %s574, 0
          %s580 = smul.addr %s43, 4
          %s581 = smul.addr %s580, 8
          %s582 = scalar_lea.hbm %s8, %s581
          %s583 = sshll.u32 %s582, 4
          %s584 = int_to_ptr.hbm [resolvable:$true] %s583
          %s585 = sshll.u32 %s577, 4
          %s586 = int_to_ptr.vmem [resolvable:$true] %s585
          %591 = dma.hbm_to_vmem [thread:$0]  %s584, 512, %s586, %s574, 128, 128, 8
        $region60: #{tpu_custom_call.1} parent=23 // pred_fallthru
          _
        // Predicated region
        $region61: #{tpu_custom_call.1} parent=23 // pred_check
          %p592 = pneg %p301
        $region62: #{tpu_custom_call.1} parent=23 // pred_check_branch
          %594 = sbr.rel (%p592) target = $region64
        $region63: #{tpu_custom_call.1} parent=23 // pred_region
          %p595 = scmp.lt.s32.totalorder %s43, 1
          %s596 = scalar_select %p595, %s43, 1
          %s597 = scalar_lea.vmem %s9, %s596
        $region64: #{tpu_custom_call.1} parent=23 // pred_fallthru
          _
        // Predicated region
        $region65: #{tpu_custom_call.1} parent=23 // pred_check
          %p598 = pneg %p327
        $region66: #{tpu_custom_call.1} parent=23 // pred_check_branch
          %600 = sbr.rel (%p598) target = $region68
        $region67: #{tpu_custom_call.1} parent=23 // pred_region
          %s601 = sand.u32 %s35, 1
          %s602 = scalar_lea.sflag [#allocation14], %s601
          %s603 = sand.u32 %s317, 1
          %s604 = smul.addr %s603, 32
          %s605 = scalar_lea.vmem [#allocation15], %s604
          %607 = vsyncadd %s602, 0
          %s608 = smul.addr %s43, 4
          %s609 = smul.addr %s608, 8
          %s610 = scalar_lea.hbm %s10, %s609
          %s611 = sshll.u32 %s610, 4
          %s612 = int_to_ptr.hbm [resolvable:$true] %s611
          %s613 = sshll.u32 %s605, 4
          %s614 = int_to_ptr.vmem [resolvable:$true] %s613
          %619 = dma.hbm_to_vmem [thread:$0]  %s612, 512, %s614, %s602, 128, 128, 8
        $region68: #{tpu_custom_call.1} parent=23 // pred_fallthru
          _
        // Predicated region
        $region69: #{tpu_custom_call.1} parent=23 // pred_check
          %p620 = pneg %p353
        $region70: #{tpu_custom_call.1} parent=23 // pred_check_branch
          %622 = sbr.rel (%p620) target = $region72
        $region71: #{tpu_custom_call.1} parent=23 // pred_region
          %p623 = scmp.lt.s32.totalorder %s43, 1
          %s624 = scalar_select %p623, %s43, 1
          %s625 = scalar_lea.vmem %s11, %s624
        $region72: #{tpu_custom_call.1} parent=23 // pred_fallthru
          _
      $region24: #{tpu_custom_call.1} parent=5 // pred_fallthru
        _
      %p626 = scmp.le.s32.totalorder 1, %s35
      %p627 = scmp.lt.s32.totalorder %s35, 5
      %p628 = pnand %p626, %p627
      %p629 = pneg %p628
      // Predicated region
      $region73: #{tpu_custom_call.1} parent=5 // pred_check
        _
      $region74: #{tpu_custom_call.1} parent=5 // pred_check_branch
        %631 = sbr.rel (%p628) target = $region76
      $region75: #{tpu_custom_call.1} parent=5 // pred_region
        %s632 = ssub.s32 %s35, 1
        %s633 = sand.u32 %s60, 1
        %s634 = scalar_lea.sflag [#allocation5], %s633
        %s635 = sand.u32 %s60, 1
        %s636 = smul.addr %s635, 16
        %s637 = scalar_lea.vmem [#allocation4], %s636
        // Predicated region
        $region77: #{tpu_custom_call.1} parent=75 // pred_check
          %p638 = pneg %p73
        $region78: #{tpu_custom_call.1} parent=75 // pred_check_branch
          %640 = sbr.rel (%p638) target = $region80
        $region79: #{tpu_custom_call.1} parent=75 // pred_region
          %642 = dma.done %s634, 256
        $region80: #{tpu_custom_call.1} parent=75 // pred_fallthru
          _
        %s643 = sand.u32 %s40, 1
        %s644 = scalar_lea.sflag [#allocation8], %s643
        %s645 = sand.u32 %s86, 1
        %s646 = smul.addr %s645, 32
        %s647 = scalar_lea.vmem [#allocation7], %s646
        // Predicated region
        $region81: #{tpu_custom_call.1} parent=75 // pred_check
          %p648 = pneg %p99
        $region82: #{tpu_custom_call.1} parent=75 // pred_check_branch
          %650 = sbr.rel (%p648) target = $region84
        $region83: #{tpu_custom_call.1} parent=75 // pred_region
          %652 = dma.done %s644, 512
        $region84: #{tpu_custom_call.1} parent=75 // pred_fallthru
          _
        %s653 = sand.u32 %s40, 1
        %s654 = scalar_lea.sflag [#allocation8], %s653
        %s655 = sand.u32 %s112, 1
        %s656 = smul.addr %s655, 32
        %s657 = scalar_lea.vmem [#allocation9], %s656
        // Predicated region
        $region85: #{tpu_custom_call.1} parent=75 // pred_check
          %p658 = pneg %p125
        $region86: #{tpu_custom_call.1} parent=75 // pred_check_branch
          %660 = sbr.rel (%p658) target = $region88
        $region87: #{tpu_custom_call.1} parent=75 // pred_region
          %662 = dma.done %s654, 512
        $region88: #{tpu_custom_call.1} parent=75 // pred_fallthru
          _
        %s663 = sand.u32 %s40, 1
        %s664 = scalar_lea.sflag [#allocation11], %s663
        %s665 = sand.u32 %s164, 1
        %s666 = scalar_lea.vmem [#allocation10], %s665
        // Predicated region
        $region89: #{tpu_custom_call.1} parent=75 // pred_check
          %p667 = pneg %p177
        $region90: #{tpu_custom_call.1} parent=75 // pred_check_branch
          %669 = sbr.rel (%p667) target = $region92
        $region91: #{tpu_custom_call.1} parent=75 // pred_region
          %671 = dma.done %s664, 16
        $region92: #{tpu_custom_call.1} parent=75 // pred_fallthru
          _
        %s672 = sand.u32 %s40, 1
        %s673 = scalar_lea.sflag [#allocation11], %s672
        %s674 = sand.u32 %s216, 1
        %s675 = scalar_lea.vmem [#allocation12], %s674
        // Predicated region
        $region93: #{tpu_custom_call.1} parent=75 // pred_check
          %p676 = pneg %p229
        $region94: #{tpu_custom_call.1} parent=75 // pred_check_branch
          %678 = sbr.rel (%p676) target = $region96
        $region95: #{tpu_custom_call.1} parent=75 // pred_region
          %680 = dma.done %s673, 16
        $region96: #{tpu_custom_call.1} parent=75 // pred_fallthru
          _
        %s681 = sand.u32 %s40, 1
        %s682 = scalar_lea.sflag [#allocation14], %s681
        %s683 = sand.u32 %s268, 1
        %s684 = smul.addr %s683, 32
        %s685 = scalar_lea.vmem [#allocation13], %s684
        // Predicated region
        $region97: #{tpu_custom_call.1} parent=75 // pred_check
          %p686 = pneg %p281
        $region98: #{tpu_custom_call.1} parent=75 // pred_check_branch
          %688 = sbr.rel (%p686) target = $region100
        $region99: #{tpu_custom_call.1} parent=75 // pred_region
          %690 = dma.done %s682, 512
        $region100: #{tpu_custom_call.1} parent=75 // pred_fallthru
          _
        %s691 = sand.u32 %s40, 1
        %s692 = scalar_lea.sflag [#allocation14], %s691
        %s693 = sand.u32 %s320, 1
        %s694 = smul.addr %s693, 32
        %s695 = scalar_lea.vmem [#allocation15], %s694
        // Predicated region
        $region101: #{tpu_custom_call.1} parent=75 // pred_check
          %p696 = pneg %p333
        $region102: #{tpu_custom_call.1} parent=75 // pred_check_branch
          %698 = sbr.rel (%p696) target = $region104
        $region103: #{tpu_custom_call.1} parent=75 // pred_region
          %700 = dma.done %s692, 512
        $region104: #{tpu_custom_call.1} parent=75 // pred_fallthru
          _
        %s701 = sand.u32 %s60, 1
        %s702 = scalar_lea.sflag [#allocation5], %s701
        %s703 = sand.u32 %s60, 1
        %s704 = smul.addr %s703, 16
        %s705 = scalar_lea.vmem [#allocation4], %s704
        %p706 = pneg %p73
        %p707 = pneg %p70
        %s708 = sand.u32 %s40, 1
        %s709 = scalar_lea.sflag [#allocation8], %s708
        %s710 = sand.u32 %s86, 1
        %s711 = smul.addr %s710, 32
        %s712 = scalar_lea.vmem [#allocation7], %s711
        %p713 = pneg %p99
        %p714 = pneg %p96
        %s715 = sand.u32 %s40, 1
        %s716 = scalar_lea.sflag [#allocation8], %s715
        %s717 = sand.u32 %s112, 1
        %s718 = smul.addr %s717, 32
        %s719 = scalar_lea.vmem [#allocation9], %s718
        %p720 = pneg %p125
        %p721 = pneg %p122
        %p722 = scmp.lt.s32.totalorder %s45, 1
        %s723 = scalar_select %p722, %s45, 1
        %s724 = scalar_lea.vmem %s3, %s723
        %p725 = pneg %p151
        %p726 = pneg %p148
        %s727 = sand.u32 %s40, 1
        %s728 = scalar_lea.sflag [#allocation11], %s727
        %s729 = sand.u32 %s164, 1
        %s730 = scalar_lea.vmem [#allocation10], %s729
        %p731 = pneg %p177
        %p732 = pneg %p174
        %p733 = scmp.lt.s32.totalorder %s45, 1
        %s734 = scalar_select %p733, %s45, 1
        %s735 = scalar_lea.vmem %s5, %s734
        %p736 = pneg %p203
        %p737 = pneg %p200
        %s738 = sand.u32 %s40, 1
        %s739 = scalar_lea.sflag [#allocation11], %s738
        %s740 = sand.u32 %s216, 1
        %s741 = scalar_lea.vmem [#allocation12], %s740
        %p742 = pneg %p229
        %p743 = pneg %p226
        %p744 = scmp.lt.s32.totalorder %s45, 1
        %s745 = scalar_select %p744, %s45, 1
        %s746 = scalar_lea.vmem %s7, %s745
        %p747 = pneg %p255
        %p748 = pneg %p252
        %s749 = sand.u32 %s40, 1
        %s750 = scalar_lea.sflag [#allocation14], %s749
        %s751 = sand.u32 %s268, 1
        %s752 = smul.addr %s751, 32
        %s753 = scalar_lea.vmem [#allocation13], %s752
        %p754 = pneg %p281
        %p755 = pneg %p278
        %p756 = scmp.lt.s32.totalorder %s45, 1
        %s757 = scalar_select %p756, %s45, 1
        %s758 = scalar_lea.vmem %s9, %s757
        %p759 = pneg %p307
        %p760 = pneg %p304
        %s761 = sand.u32 %s40, 1
        %s762 = scalar_lea.sflag [#allocation14], %s761
        %s763 = sand.u32 %s320, 1
        %s764 = smul.addr %s763, 32
        %s765 = scalar_lea.vmem [#allocation15], %s764
        %p766 = pneg %p333
        %p767 = pneg %p330
        %p768 = scmp.lt.s32.totalorder %s45, 1
        %s769 = scalar_select %p768, %s45, 1
        %s770 = scalar_lea.vmem %s11, %s769
        %p771 = pneg %p359
        %p772 = pneg %p356
        %p773 = pneg %p380
        %p774 = pneg %p377
        %p775 = pneg %p401
        %p776 = pneg %p398
        %p777 = pneg %p427
        %p778 = pneg %p424
        %s779 = sand.u32 %s414, 1
        %s780 = scalar_lea.sflag [#allocation6], %s779
        %s781 = sand.u32 %s414, 1
        %s782 = smul.addr %s781, 16
        %s783 = scalar_lea.vmem [#allocation16], %s782
        %p784 = scmp.lt.s32.totalorder %s45, 1
        %s785 = scalar_select %p784, %s45, 1
        %s786 = scalar_lea.vmem %s3, %s785
        %p787 = scmp.lt.s32.totalorder %s45, 1
        %s788 = scalar_select %p787, %s45, 1
        %s789 = scalar_lea.vmem %s5, %s788
        %p790 = scmp.lt.s32.totalorder %s45, 1
        %s791 = scalar_select %p790, %s45, 1
        %s792 = scalar_lea.vmem %s7, %s791
        %p793 = scmp.lt.s32.totalorder %s45, 1
        %s794 = scalar_select %p793, %s45, 1
        %s795 = scalar_lea.vmem %s9, %s794
        %p796 = scmp.lt.s32.totalorder %s45, 1
        %s797 = scalar_select %p796, %s45, 1
        %s798 = scalar_lea.vmem %s11, %s797
        %p799 = scmp.eq.s32.totalorder %s45, 0
        // Predicated region
        $region105: #{tpu_custom_call.1} parent=75 // pred_check
          %p800 = pneg %p799
        $region106: #{tpu_custom_call.1} parent=75 // pred_check_branch
          %802 = sbr.rel (%p800) target = $region108
        $region107: #{tpu_custom_call.1} parent=75 // pred_region
          %v803 = vld [vmem:[%s637] sm:$0xff]
          %v804 = vld [vmem:[%s637 + $0x8] sm:$0xff]
          %vm805 = vcmask 261120
          %806 = vst.msk [vmem:[#allocation2] sm:$0xff] %vm805, %v803
          %807 = vst.msk [vmem:[#allocation2 + $0x8] sm:$0xff] %vm805, %v804
        $region108: #{tpu_custom_call.1} parent=75 // pred_fallthru
          _
        %v808 = vld [vmem:[#allocation2] sm:$0xff]
        %v809 = vld [vmem:[#allocation2 + $0x8] sm:$0xff]
        %v810 = vld [vmem:[%s666] sm:$0x1]
        %v811 = vld [vmem:[%s789] sm:$0x1]
        %vm812 = vcmask 261120
        %v813 = vsel %vm812, %v808, 0.0
        %814 = vadd.xlane.f32.xlu0 %v813
        %v815 = vpop.xlane.xlu0 %814
        %v816 = vsel %vm812, %v809, 0.0
        %817 = vadd.xlane.f32.xlu0 %v816
        %v818 = vpop.xlane.xlu0 %817
        %v819 = vrcp.pop 32.0
        %v820 = vmul.f32 32.0, %v819
        %v821 = vsub.f32 1.0, %v820
        %v822 = vmul.f32 %v819, %v821
        %v823 = vadd.f32 %v819, %v822
        %vm824 = vweird.f32 %v819
        %v825 = vsel %vm824, %v819, %v823
        %v826 = vmul.f32 %v815, %v825
        %v827 = vmul.f32 %v818, %v825
        %v828 = vsub.f32 %v808, %v826
        %v829 = vsub.f32 %v809, %v827
        %v830 = vmul.f32 %v828, %v828
        %v831 = vmul.f32 %v829, %v829
        %v832 = vsel %vm812, %v830, 0.0
        %833 = vadd.xlane.f32.xlu0 %v832
        %v834 = vpop.xlane.xlu0 %833
        %v835 = vsel %vm812, %v831, 0.0
        %836 = vadd.xlane.f32.xlu0 %v835
        %v837 = vpop.xlane.xlu0 %836
        %v838 = vmul.f32 %v834, %v825
        %v839 = vmul.f32 %v837, %v825
        %v840 = vadd.f32 %v838, 1e-05
        %v841 = vadd.f32 %v839, 1e-05
        %v842 = vrsqrt.pop %v840
        %v843 = vmul.f32 %v842, %v840
        %v844 = vmul.f32 %v843, %v842
        %v845 = vmul.f32 0.5, %v844
        %v846 = vsub.f32 1.5, %v845
        %v847 = vmul.f32 %v842, %v846
        %vm848 = vweird.f32 %v840
        %vm849 = vweird.f32 %v842
        %vm850 = vmor %vm848, %vm849
        %v851 = vsel %vm850, %v842, %v847
        %v852 = vrsqrt.pop %v841
        %v853 = vmul.f32 %v852, %v841
        %v854 = vmul.f32 %v853, %v852
        %v855 = vmul.f32 0.5, %v854
        %v856 = vsub.f32 1.5, %v855
        %v857 = vmul.f32 %v852, %v856
        %vm858 = vweird.f32 %v841
        %vm859 = vweird.f32 %v852
        %vm860 = vmor %vm858, %vm859
        %v861 = vsel %vm860, %v852, %v857
        %v862 = vmul.f32 %v828, %v851
        %v863 = vmul.f32 %v829, %v861
        %v865 = vperm.slane %v810, 0
        %v867 = vmul.f32 %v862, %v865
        %v868 = vmul.f32 %v863, %v865
        %v870 = vperm.slane %v811, 0
        %v872 = vadd.f32 %v867, %v870
        %v873 = vadd.f32 %v868, %v870
        %v874 = vld [vmem:[%s647] sm:$0xff]
        %v875 = vld [vmem:[%s647 + $0x8] sm:$0xff]
        %v876 = vld [vmem:[%s647 + $0x10] sm:$0xff]
        %v877 = vld [vmem:[%s647 + $0x18] sm:$0xff]
        %v879 = vsel %vm812, %v872, 0
        %v882 = vsel %vm812, %v873, 0
        %884 = vmatpush.msra.mxu0 0.0
        %885 = vmatpush.msra.mxu0 0.0
        %886 = vmatpush.msra.mxu0 0.0
        %887 = vmatpush.msra.mxu0 0.0
        %888 = vmatpush.msra.mxu0 0.0
        %889 = vmatpush.msra.mxu0 0.0
        %890 = vmatpush.msra.mxu0 0.0
        %891 = vmatpush.msra.mxu0 0.0
        %892 = vmatpush.msra.mxu0 0.0
        %893 = vmatpush.msra.mxu0 0.0
        %894 = vmatpush.msra.mxu0 0.0
        %895 = vmatpush.msra.mxu0 0.0
        %896 = vmatpush.msra.mxu0 %v877
        %897 = vmatpush.msra.mxu0 %v876
        %898 = vmatpush.msra.mxu0 %v875
        %899 = vmatpush.msra.mxu0 %v874
        %900 = vmatmul.f32.gmra.mxu0 %v879
        %v901 = vpop.f32.mrf.mxu0
        %v902 = vadd.f32 0.0, %v901
        %903 = vmatmul.f32.gmra.mxu0 %v882
        %v904 = vpop.f32.mrf.mxu0
        %v905 = vadd.f32 0.0, %v904
        %906 = vdwg.mxu0
        %909 = vrot.lane.b32.xlu0 %v902, 96
        %v910 = vpop.permute.xlu0 %909
        %911 = vrot.lane.b32.xlu0 %v905, 96
        %v912 = vpop.permute.xlu0 %911
        %vm913 = vcmask 130048
        %v914 = vsel %vm913, %v902, 0
        %v916 = vsel %vm913, %v905, 0
        %v918 = vsel %vm913, %v910, 0
        %v920 = vsel %vm913, %v912, 0
        %922 = vmatpush.xpose.msra.mxu0 0.0
        %923 = vmatpush.xpose.msra.mxu0 0.0
        %924 = vmatpush.xpose.msra.mxu0 0.0
        %925 = vmatpush.xpose.msra.mxu0 0.0
        %926 = vmatpush.xpose.msra.mxu0 0.0
        %927 = vmatpush.xpose.msra.mxu0 0.0
        %928 = vmatpush.xpose.msra.mxu0 0.0
        %929 = vmatpush.xpose.msra.mxu0 0.0
        %930 = vmatpush.xpose.msra.mxu0 0.0
        %931 = vmatpush.xpose.msra.mxu0 0.0
        %932 = vmatpush.xpose.msra.mxu0 0.0
        %933 = vmatpush.xpose.msra.mxu0 0.0
        %934 = vmatpush.xpose.msra.mxu0 0.0
        %935 = vmatpush.xpose.msra.mxu0 0.0
        %936 = vmatpush.xpose.msra.mxu0 %v920
        %937 = vmatpush.xpose.msra.mxu0 %v918
        %938 = vmatmul.f32.gmra.mxu0 %v914
        %v939 = vpop.f32.mrf.mxu0
        %v940 = vadd.f32 0.0, %v939
        %941 = vmatmul.f32.gmra.mxu0 %v916
        %v942 = vpop.f32.mrf.mxu0
        %v943 = vadd.f32 0.0, %v942
        %944 = vdwg.mxu0
        %v945 = vmul.f32 %v940, 0.25
        %v946 = vmul.f32 %v943, 0.25
        %v947 = vsel %vm913, %v945, -inf
        %948 = vmax.xlane.f32.xlu0 %v947
        %v949 = vpop.xlane.xlu0 %948
        %v950 = vsel %vm913, %v946, -inf
        %951 = vmax.xlane.f32.xlu0 %v950
        %v952 = vpop.xlane.xlu0 %951
        %v953 = vsub.f32 %v945, %v949
        %v954 = vsub.f32 %v946, %v952
        %v955 = vmul.f32 %v953, 1.442695
        %v956 = vpow.pop %v955
        %v957 = vmul.f32 %v954, 1.442695
        %v958 = vpow.pop %v957
        %v959 = vsel %vm913, %v956, 0.0
        %960 = vadd.xlane.f32.xlu0 %v959
        %v961 = vpop.xlane.xlu0 %960
        %v962 = vsel %vm913, %v958, 0.0
        %963 = vadd.xlane.f32.xlu0 %v962
        %v964 = vpop.xlane.xlu0 %963
        %v965 = vrcp.pop %v961
        %v966 = vrcp.pop %v964
        %v967 = vmul.f32 %v956, %v965
        %v968 = vmul.f32 %v958, %v966
        %969 = vrot.lane.b32.xlu0 %v902, 64
        %v970 = vpop.permute.xlu0 %969
        %971 = vrot.lane.b32.xlu0 %v905, 64
        %v972 = vpop.permute.xlu0 %971
        %v976 = vsel %vm913, %v967, 0
        %v979 = vsel %vm913, %v968, 0
        %981 = vmatpush.msra.mxu0 0.0
        %982 = vmatpush.msra.mxu0 0.0
        %983 = vmatpush.msra.mxu0 0.0
        %984 = vmatpush.msra.mxu0 0.0
        %985 = vmatpush.msra.mxu0 0.0
        %986 = vmatpush.msra.mxu0 0.0
        %987 = vmatpush.msra.mxu0 0.0
        %988 = vmatpush.msra.mxu0 0.0
        %989 = vmatpush.msra.mxu0 0.0
        %990 = vmatpush.msra.mxu0 0.0
        %991 = vmatpush.msra.mxu0 0.0
        %992 = vmatpush.msra.mxu0 0.0
        %993 = vmatpush.msra.mxu0 0.0
        %994 = vmatpush.msra.mxu0 0.0
        %995 = vmatpush.msra.mxu0 %v972
        %996 = vmatpush.msra.mxu0 %v970
        %997 = vmatmul.f32.gmra.mxu0 %v976
        %v998 = vpop.f32.mrf.mxu0
        %v999 = vadd.f32 0.0, %v998
        %1000 = vmatmul.f32.gmra.mxu0 %v979
        %v1001 = vpop.f32.mrf.mxu0
        %v1002 = vadd.f32 0.0, %v1001
        %1003 = vdwg.mxu0
        %1004 = vst.msk [vmem:[#allocation3] sm:$0xff] %vm913, %v999
        %1005 = vst.msk [vmem:[#allocation3 + $0x8] sm:$0xff] %vm913, %v1002
        %1006 = vrot.lane.b32.xlu0 %v902, 112
        %v1007 = vpop.permute.xlu0 %1006
        %1008 = vrot.lane.b32.xlu0 %v905, 112
        %v1009 = vpop.permute.xlu0 %1008
        %1010 = vrot.lane.b32.xlu0 %v902, 80
        %v1011 = vpop.permute.xlu0 %1010
        %1012 = vrot.lane.b32.xlu0 %v905, 80
        %v1013 = vpop.permute.xlu0 %1012
        %v1014 = vsel %vm913, %v1007, 0
        %v1016 = vsel %vm913, %v1009, 0
        %v1018 = vsel %vm913, %v1011, 0
        %v1020 = vsel %vm913, %v1013, 0
        %1022 = vmatpush.xpose.msra.mxu0 0.0
        %1023 = vmatpush.xpose.msra.mxu0 0.0
        %1024 = vmatpush.xpose.msra.mxu0 0.0
        %1025 = vmatpush.xpose.msra.mxu0 0.0
        %1026 = vmatpush.xpose.msra.mxu0 0.0
        %1027 = vmatpush.xpose.msra.mxu0 0.0
        %1028 = vmatpush.xpose.msra.mxu0 0.0
        %1029 = vmatpush.xpose.msra.mxu0 0.0
        %1030 = vmatpush.xpose.msra.mxu0 0.0
        %1031 = vmatpush.xpose.msra.mxu0 0.0
        %1032 = vmatpush.xpose.msra.mxu0 0.0
        %1033 = vmatpush.xpose.msra.mxu0 0.0
        %1034 = vmatpush.xpose.msra.mxu0 0.0
        %1035 = vmatpush.xpose.msra.mxu0 0.0
        %1036 = vmatpush.xpose.msra.mxu0 %v1020
        %1037 = vmatpush.xpose.msra.mxu0 %v1018
        %1038 = vmatmul.f32.gmra.mxu0 %v1014
        %v1039 = vpop.f32.mrf.mxu0
        %v1040 = vadd.f32 0.0, %v1039
        %1041 = vmatmul.f32.gmra.mxu0 %v1016
        %v1042 = vpop.f32.mrf.mxu0
        %v1043 = vadd.f32 0.0, %v1042
        %1044 = vdwg.mxu0
        %v1045 = vmul.f32 %v1040, 0.25
        %v1046 = vmul.f32 %v1043, 0.25
        %v1047 = vsel %vm913, %v1045, -inf
        %1048 = vmax.xlane.f32.xlu0 %v1047
        %v1049 = vpop.xlane.xlu0 %1048
        %v1050 = vsel %vm913, %v1046, -inf
        %1051 = vmax.xlane.f32.xlu0 %v1050
        %v1052 = vpop.xlane.xlu0 %1051
        %v1053 = vsub.f32 %v1045, %v1049
        %v1054 = vsub.f32 %v1046, %v1052
        %v1055 = vmul.f32 %v1053, 1.442695
        %v1056 = vpow.pop %v1055
        %v1057 = vmul.f32 %v1054, 1.442695
        %v1058 = vpow.pop %v1057
        %v1059 = vsel %vm913, %v1056, 0.0
        %1060 = vadd.xlane.f32.xlu0 %v1059
        %v1061 = vpop.xlane.xlu0 %1060
        %v1062 = vsel %vm913, %v1058, 0.0
        %1063 = vadd.xlane.f32.xlu0 %v1062
        %v1064 = vpop.xlane.xlu0 %1063
        %v1065 = vrcp.pop %v1061
        %v1066 = vrcp.pop %v1064
        %v1067 = vmul.f32 %v1056, %v1065
        %v1068 = vmul.f32 %v1058, %v1066
        %1069 = vrot.lane.b32.xlu0 %v902, 48
        %v1070 = vpop.permute.xlu0 %1069
        %1071 = vrot.lane.b32.xlu0 %v905, 48
        %v1072 = vpop.permute.xlu0 %1071
        %v1076 = vsel %vm913, %v1067, 0
        %v1079 = vsel %vm913, %v1068, 0
        %1081 = vmatpush.msra.mxu0 0.0
        %1082 = vmatpush.msra.mxu0 0.0
        %1083 = vmatpush.msra.mxu0 0.0
        %1084 = vmatpush.msra.mxu0 0.0
        %1085 = vmatpush.msra.mxu0 0.0
        %1086 = vmatpush.msra.mxu0 0.0
        %1087 = vmatpush.msra.mxu0 0.0
        %1088 = vmatpush.msra.mxu0 0.0
        %1089 = vmatpush.msra.mxu0 0.0
        %1090 = vmatpush.msra.mxu0 0.0
        %1091 = vmatpush.msra.mxu0 0.0
        %1092 = vmatpush.msra.mxu0 0.0
        %1093 = vmatpush.msra.mxu0 0.0
        %1094 = vmatpush.msra.mxu0 0.0
        %1095 = vmatpush.msra.mxu0 %v1072
        %1096 = vmatpush.msra.mxu0 %v1070
        %1097 = vmatmul.f32.gmra.mxu0 %v1076
        %v1098 = vpop.f32.mrf.mxu0
        %v1099 = vadd.f32 0.0, %v1098
        %1100 = vmatmul.f32.gmra.mxu0 %v1079
        %v1101 = vpop.f32.mrf.mxu0
        %v1102 = vadd.f32 0.0, %v1101
        %1103 = vdwg.mxu0
        %1106 = vrot.lane.b32.xlu0 %v1099, 16
        %v1107 = vpop.permute.xlu0 %1106
        %1108 = vrot.lane.b32.xlu0 %v1102, 16
        %v1109 = vpop.permute.xlu0 %1108
        %vm1112 = vcmask 261248
        %1113 = vst.msk [vmem:[#allocation3] sm:$0xff] %vm1112, %v1107
        %1114 = vst.msk [vmem:[#allocation3 + $0x8] sm:$0xff] %vm1112, %v1109
        %v1115 = vld [vmem:[#allocation3] sm:$0xff]
        %v1116 = vld [vmem:[#allocation3 + $0x8] sm:$0xff]
        %v1117 = vld [vmem:[%s657] sm:$0xff]
        %v1118 = vld [vmem:[%s657 + $0x8] sm:$0xff]
        %v1119 = vld [vmem:[%s657 + $0x10] sm:$0xff]
        %v1120 = vld [vmem:[%s657 + $0x18] sm:$0xff]
        %v1121 = vld [vmem:[%s786] sm:$0x1]
        %v1123 = vperm.slane %v1121, 0
        %v1126 = vsel %vm812, %v1115, 0
        %v1129 = vsel %vm812, %v1116, 0
        %1131 = vmatpush.msra.mxu0 0.0
        %1132 = vmatpush.msra.mxu0 0.0
        %1133 = vmatpush.msra.mxu0 0.0
        %1134 = vmatpush.msra.mxu0 0.0
        %1135 = vmatpush.msra.mxu0 0.0
        %1136 = vmatpush.msra.mxu0 0.0
        %1137 = vmatpush.msra.mxu0 0.0
        %1138 = vmatpush.msra.mxu0 0.0
        %1139 = vmatpush.msra.mxu0 0.0
        %1140 = vmatpush.msra.mxu0 0.0
        %1141 = vmatpush.msra.mxu0 0.0
        %1142 = vmatpush.msra.mxu0 0.0
        %1143 = vmatpush.msra.mxu0 %v1120
        %1144 = vmatpush.msra.mxu0 %v1119
        %1145 = vmatpush.msra.mxu0 %v1118
        %1146 = vmatpush.msra.mxu0 %v1117
        %1147 = vmatmul.f32.gmra.mxu0 %v1126
        %v1148 = vpop.f32.mrf.mxu0
        %v1149 = vadd.f32 %v1123, %v1148
        %1150 = vmatmul.f32.gmra.mxu0 %v1129
        %v1151 = vpop.f32.mrf.mxu0
        %v1152 = vadd.f32 %v1123, %v1151
        %1153 = vdwg.mxu0
        %v1154 = vadd.f32 %v808, %v1149
        %v1155 = vadd.f32 %v809, %v1152
        %v1156 = vld [vmem:[%s675] sm:$0x1]
        %v1157 = vld [vmem:[%s792] sm:$0x1]
        %v1158 = vsel %vm812, %v1154, 0.0
        %1159 = vadd.xlane.f32.xlu0 %v1158
        %v1160 = vpop.xlane.xlu0 %1159
        %v1161 = vsel %vm812, %v1155, 0.0
        %1162 = vadd.xlane.f32.xlu0 %v1161
        %v1163 = vpop.xlane.xlu0 %1162
        %v1164 = vmul.f32 %v1160, %v825
        %v1165 = vmul.f32 %v1163, %v825
        %v1166 = vsub.f32 %v1154, %v1164
        %v1167 = vsub.f32 %v1155, %v1165
        %v1168 = vmul.f32 %v1166, %v1166
        %v1169 = vmul.f32 %v1167, %v1167
        %v1170 = vsel %vm812, %v1168, 0.0
        %1171 = vadd.xlane.f32.xlu0 %v1170
        %v1172 = vpop.xlane.xlu0 %1171
        %v1173 = vsel %vm812, %v1169, 0.0
        %1174 = vadd.xlane.f32.xlu0 %v1173
        %v1175 = vpop.xlane.xlu0 %1174
        %v1176 = vmul.f32 %v1172, %v825
        %v1177 = vmul.f32 %v1175, %v825
        %v1178 = vadd.f32 %v1176, 1e-05
        %v1179 = vadd.f32 %v1177, 1e-05
        %v1180 = vrsqrt.pop %v1178
        %v1181 = vmul.f32 %v1180, %v1178
        %v1182 = vmul.f32 %v1181, %v1180
        %v1183 = vmul.f32 0.5, %v1182
        %v1184 = vsub.f32 1.5, %v1183
        %v1185 = vmul.f32 %v1180, %v1184
        %vm1186 = vweird.f32 %v1178
        %vm1187 = vweird.f32 %v1180
        %vm1188 = vmor %vm1186, %vm1187
        %v1189 = vsel %vm1188, %v1180, %v1185
        %v1190 = vrsqrt.pop %v1179
        %v1191 = vmul.f32 %v1190, %v1179
        %v1192 = vmul.f32 %v1191, %v1190
        %v1193 = vmul.f32 0.5, %v1192
        %v1194 = vsub.f32 1.5, %v1193
        %v1195 = vmul.f32 %v1190, %v1194
        %vm1196 = vweird.f32 %v1179
        %vm1197 = vweird.f32 %v1190
        %vm1198 = vmor %vm1196, %vm1197
        %v1199 = vsel %vm1198, %v1190, %v1195
        %v1200 = vmul.f32 %v1166, %v1189
        %v1201 = vmul.f32 %v1167, %v1199
        %v1203 = vperm.slane %v1156, 0
        %v1205 = vmul.f32 %v1200, %v1203
        %v1206 = vmul.f32 %v1201, %v1203
        %v1208 = vperm.slane %v1157, 0
        %v1210 = vadd.f32 %v1205, %v1208
        %v1211 = vadd.f32 %v1206, %v1208
        %v1212 = vld [vmem:[%s685] sm:$0xff]
        %v1213 = vld [vmem:[%s685 + $0x8] sm:$0xff]
        %v1214 = vld [vmem:[%s685 + $0x10] sm:$0xff]
        %v1215 = vld [vmem:[%s685 + $0x18] sm:$0xff]
        %v1216 = vld [vmem:[%s795] sm:$0x1]
        %v1218 = vperm.slane %v1216, 0
        %v1221 = vsel %vm812, %v1210, 0
        %v1224 = vsel %vm812, %v1211, 0
        %1226 = vmatpush.msra.mxu0 0.0
        %1227 = vmatpush.msra.mxu0 0.0
        %1228 = vmatpush.msra.mxu0 0.0
        %1229 = vmatpush.msra.mxu0 0.0
        %1230 = vmatpush.msra.mxu0 0.0
        %1231 = vmatpush.msra.mxu0 0.0
        %1232 = vmatpush.msra.mxu0 0.0
        %1233 = vmatpush.msra.mxu0 0.0
        %1234 = vmatpush.msra.mxu0 0.0
        %1235 = vmatpush.msra.mxu0 0.0
        %1236 = vmatpush.msra.mxu0 0.0
        %1237 = vmatpush.msra.mxu0 0.0
        %1238 = vmatpush.msra.mxu0 %v1215
        %1239 = vmatpush.msra.mxu0 %v1214
        %1240 = vmatpush.msra.mxu0 %v1213
        %1241 = vmatpush.msra.mxu0 %v1212
        %1242 = vmatmul.f32.gmra.mxu0 %v1221
        %v1243 = vpop.f32.mrf.mxu0
        %v1244 = vadd.f32 %v1218, %v1243
        %1245 = vmatmul.f32.gmra.mxu0 %v1224
        %v1246 = vpop.f32.mrf.mxu0
        %v1247 = vadd.f32 %v1218, %v1246
        %1248 = vdwg.mxu0
        %v1249 = vmul.f32 %v1244, 0.5
        %v1250 = vmul.f32 %v1247, 0.5
        %v1251 = vmul.f32 %v1244, 0.70710677
        %v1252 = vmul.f32 %v1247, 0.70710677
        %v1253 = vand.u32 2147483647, %v1251
        %v1254 = vand.u32 2147483647, %v1252
        %v1255 = vmul.f32 %v1253, 0.3275911
        %v1256 = vmul.f32 %v1254, 0.3275911
        %v1257 = vadd.f32 %v1255, 1.0
        %v1258 = vadd.f32 %v1256, 1.0
        %v1259 = vrcp.pop %v1257
        %v1260 = vmul.f32 %v1257, %v1259
        %v1261 = vsub.f32 1.0, %v1260
        %v1262 = vmul.f32 %v1259, %v1261
        %v1263 = vadd.f32 %v1259, %v1262
        %vm1264 = vweird.f32 %v1257
        %vm1265 = vweird.f32 %v1259
        %vm1266 = vmor %vm1264, %vm1265
        %v1267 = vsel %vm1266, %v1259, %v1263
        %v1268 = vand.u32 2147483647, %v1257
        %vm1269 = vcmp.eq.f32.partialorder %v1268, 8.507059e+37
        %v1270 = vand.u32 %v1257, 2147483648
        %v1271 = vor.u32 1.1754944e-38, %v1270
        %v1272 = vsel %vm1269, %v1271, %v1267
        %v1273 = vrcp.pop %v1258
        %v1274 = vmul.f32 %v1258, %v1273
        %v1275 = vsub.f32 1.0, %v1274
        %v1276 = vmul.f32 %v1273, %v1275
        %v1277 = vadd.f32 %v1273, %v1276
        %vm1278 = vweird.f32 %v1258
        %vm1279 = vweird.f32 %v1273
        %vm1280 = vmor %vm1278, %vm1279
        %v1281 = vsel %vm1280, %v1273, %v1277
        %v1282 = vand.u32 2147483647, %v1258
        %vm1283 = vcmp.eq.f32.partialorder %v1282, 8.507059e+37
        %v1284 = vand.u32 %v1258, 2147483648
        %v1285 = vor.u32 1.1754944e-38, %v1284
        %v1286 = vsel %vm1283, %v1285, %v1281
        %v1287 = vmul.f32 %v1272, 1.0614054
        %v1288 = vmul.f32 %v1286, 1.0614054
        %v1289 = vadd.f32 %v1287, -1.4531521
        %v1290 = vadd.f32 %v1288, -1.4531521
        %v1291 = vmul.f32 %v1289, %v1272
        %v1292 = vmul.f32 %v1290, %v1286
        %v1293 = vadd.f32 %v1291, 1.4214138
        %v1294 = vadd.f32 %v1292, 1.4214138
        %v1295 = vmul.f32 %v1293, %v1272
        %v1296 = vmul.f32 %v1294, %v1286
        %v1297 = vadd.f32 %v1295, -0.28449672
        %v1298 = vadd.f32 %v1296, -0.28449672
        %v1299 = vmul.f32 %v1297, %v1272
        %v1300 = vmul.f32 %v1298, %v1286
        %v1301 = vadd.f32 %v1299, 0.2548296
        %v1302 = vadd.f32 %v1300, 0.2548296
        %v1303 = vmul.f32 %v1301, %v1272
        %v1304 = vmul.f32 %v1302, %v1286
        %v1305 = vsub.f32 0.0, %v1253
        %v1306 = vsub.f32 0.0, %v1254
        %v1307 = vmul.f32 %v1305, %v1253
        %v1308 = vmul.f32 %v1306, %v1254
        %v1309 = vmul.f32 %v1307, 1.442695
        %v1310 = vpow.pop %v1309
        %v1311 = vmul.f32 %v1308, 1.442695
        %v1312 = vpow.pop %v1311
        %v1313 = vmul.f32 %v1303, %v1310
        %v1314 = vmul.f32 %v1304, %v1312
        %v1315 = vsub.f32 1.0, %v1313
        %v1316 = vsub.f32 1.0, %v1314
        %vm1317 = vcmp.ge.f32.partialorder %v1251, 0.0
        %vm1318 = vcmp.ge.f32.partialorder %v1252, 0.0
        %v1319 = vsub.f32 0.0, %v1315
        %v1320 = vsub.f32 0.0, %v1316
        %v1321 = vsel %vm1317, %v1315, %v1319
        %v1322 = vsel %vm1318, %v1316, %v1320
        %v1323 = vadd.f32 %v1321, 1.0
        %v1324 = vadd.f32 %v1322, 1.0
        %v1325 = vmul.f32 %v1249, %v1323
        %v1326 = vmul.f32 %v1250, %v1324
        %v1327 = vld [vmem:[%s695] sm:$0xff]
        %v1328 = vld [vmem:[%s695 + $0x8] sm:$0xff]
        %v1329 = vld [vmem:[%s695 + $0x10] sm:$0xff]
        %v1330 = vld [vmem:[%s695 + $0x18] sm:$0xff]
        %v1331 = vld [vmem:[%s798] sm:$0x1]
        %v1333 = vperm.slane %v1331, 0
        %v1336 = vsel %vm812, %v1325, 0
        %v1339 = vsel %vm812, %v1326, 0
        %1341 = vmatpush.msra.mxu0 0.0
        %1342 = vmatpush.msra.mxu0 0.0
        %1343 = vmatpush.msra.mxu0 0.0
        %1344 = vmatpush.msra.mxu0 0.0
        %1345 = vmatpush.msra.mxu0 0.0
        %1346 = vmatpush.msra.mxu0 0.0
        %1347 = vmatpush.msra.mxu0 0.0
        %1348 = vmatpush.msra.mxu0 0.0
        %1349 = vmatpush.msra.mxu0 0.0
        %1350 = vmatpush.msra.mxu0 0.0
        %1351 = vmatpush.msra.mxu0 0.0
        %1352 = vmatpush.msra.mxu0 0.0
        %1353 = vmatpush.msra.mxu0 %v1330
        %1354 = vmatpush.msra.mxu0 %v1329
        %1355 = vmatpush.msra.mxu0 %v1328
        %1356 = vmatpush.msra.mxu0 %v1327
        %1357 = vmatmul.f32.gmra.mxu0 %v1336
        %v1358 = vpop.f32.mrf.mxu0
        %v1359 = vadd.f32 %v1333, %v1358
        %1360 = vmatmul.f32.gmra.mxu0 %v1339
        %v1361 = vpop.f32.mrf.mxu0
        %v1362 = vadd.f32 %v1333, %v1361
        %1363 = vdwg.mxu0
        %v1364 = vadd.f32 %v1210, %v1359
        %v1365 = vadd.f32 %v1211, %v1362
        %1366 = vst.msk [vmem:[#allocation2] sm:$0xff] %vm812, %v1364
        %1367 = vst.msk [vmem:[#allocation2 + $0x8] sm:$0xff] %vm812, %v1365
        %p1368 = scmp.eq.s32.totalorder %s45, 1
        // Predicated region
        $region109: #{tpu_custom_call.1} parent=75 // pred_check
          %p1369 = pneg %p1368
        $region110: #{tpu_custom_call.1} parent=75 // pred_check_branch
          %1371 = sbr.rel (%p1369) target = $region112
        $region111: #{tpu_custom_call.1} parent=75 // pred_region
          %v1372 = vld [vmem:[%s12] sm:$0x1]
          %v1373 = vld [vmem:[%s13] sm:$0x1]
          %v1374 = vsel %vm812, %v1364, 0.0
          %1375 = vadd.xlane.f32.xlu0 %v1374
          %v1376 = vpop.xlane.xlu0 %1375
          %v1377 = vsel %vm812, %v1365, 0.0
          %1378 = vadd.xlane.f32.xlu0 %v1377
          %v1379 = vpop.xlane.xlu0 %1378
          %v1380 = vmul.f32 %v1376, %v825
          %v1381 = vmul.f32 %v1379, %v825
          %v1382 = vsub.f32 %v1364, %v1380
          %v1383 = vsub.f32 %v1365, %v1381
          %v1384 = vmul.f32 %v1382, %v1382
          %v1385 = vmul.f32 %v1383, %v1383
          %v1386 = vsel %vm812, %v1384, 0.0
          %1387 = vadd.xlane.f32.xlu0 %v1386
          %v1388 = vpop.xlane.xlu0 %1387
          %v1389 = vsel %vm812, %v1385, 0.0
          %1390 = vadd.xlane.f32.xlu0 %v1389
          %v1391 = vpop.xlane.xlu0 %1390
          %v1392 = vmul.f32 %v1388, %v825
          %v1393 = vmul.f32 %v1391, %v825
          %v1394 = vadd.f32 %v1392, 1e-05
          %v1395 = vadd.f32 %v1393, 1e-05
          %v1396 = vrsqrt.pop %v1394
          %v1397 = vmul.f32 %v1396, %v1394
          %v1398 = vmul.f32 %v1397, %v1396
          %v1399 = vmul.f32 0.5, %v1398
          %v1400 = vsub.f32 1.5, %v1399
          %v1401 = vmul.f32 %v1396, %v1400
          %vm1402 = vweird.f32 %v1394
          %vm1403 = vweird.f32 %v1396
          %vm1404 = vmor %vm1402, %vm1403
          %v1405 = vsel %vm1404, %v1396, %v1401
          %v1406 = vrsqrt.pop %v1395
          %v1407 = vmul.f32 %v1406, %v1395
          %v1408 = vmul.f32 %v1407, %v1406
          %v1409 = vmul.f32 0.5, %v1408
          %v1410 = vsub.f32 1.5, %v1409
          %v1411 = vmul.f32 %v1406, %v1410
          %vm1412 = vweird.f32 %v1395
          %vm1413 = vweird.f32 %v1406
          %vm1414 = vmor %vm1412, %vm1413
          %v1415 = vsel %vm1414, %v1406, %v1411
          %v1416 = vmul.f32 %v1382, %v1405
          %v1417 = vmul.f32 %v1383, %v1415
          %v1419 = vperm.slane %v1372, 0
          %v1421 = vmul.f32 %v1416, %v1419
          %v1422 = vmul.f32 %v1417, %v1419
          %v1424 = vperm.slane %v1373, 0
          %v1426 = vadd.f32 %v1421, %v1424
          %v1427 = vadd.f32 %v1422, %v1424
          %1428 = vst.msk [vmem:[%s783] sm:$0xff] %vm812, %v1426
          %1429 = vst.msk [vmem:[%s783 + $0x8] sm:$0xff] %vm812, %v1427
        $region112: #{tpu_custom_call.1} parent=75 // pred_fallthru
          _
        %s1430 = sand.u32 %s414, 1
        %s1431 = scalar_lea.sflag [#allocation6], %s1430
        %s1432 = sand.u32 %s414, 1
        %s1433 = smul.addr %s1432, 16
        %s1434 = scalar_lea.vmem [#allocation16], %s1433
        // Predicated region
        $region113: #{tpu_custom_call.1} parent=75 // pred_check
          %p1435 = pneg %p424
        $region114: #{tpu_custom_call.1} parent=75 // pred_check_branch
          %1437 = sbr.rel (%p1435) target = $region116
        $region115: #{tpu_custom_call.1} parent=75 // pred_region
          %1439 = vsyncadd %s1431, 0
          %s1440 = smul.addr %s44, 2
          %s1441 = smul.addr %s1440, 8
          %s1442 = scalar_lea.hbm %s14, %s1441
          %s1443 = sshll.u32 %s1434, 4
          %s1444 = int_to_ptr.vmem [resolvable:$true] %s1443
          %s1445 = sshll.u32 %s1442, 4
          %s1446 = int_to_ptr.hbm [resolvable:$true] %s1445
          %1451 = dma.vmem_to_hbm [thread:$0]  %s1444, 256, %s1446, %s1431, 128, 128, 8
        $region116: #{tpu_custom_call.1} parent=75 // pred_fallthru
          _
      $region76: #{tpu_custom_call.1} parent=5 // pred_fallthru
        _
      %p1452 = scmp.le.s32.totalorder 2, %s35
      // Predicated region
      $region117: #{tpu_custom_call.1} parent=5 // pred_check
        %p1453 = pneg %p1452
      $region118: #{tpu_custom_call.1} parent=5 // pred_check_branch
        %1455 = sbr.rel (%p1453) target = $region120
      $region119: #{tpu_custom_call.1} parent=5 // pred_region
        %s1456 = ssub.s32 %s35, 2
        // Predicated region
        $region121: #{tpu_custom_call.1} parent=119 // pred_check
          %p1457 = pneg %p430
        $region122: #{tpu_custom_call.1} parent=119 // pred_check_branch
          %1459 = sbr.rel (%p1457) target = $region124
        $region123: #{tpu_custom_call.1} parent=119 // pred_region
          %s1460 = sand.u32 %s415, 1
          %s1461 = scalar_lea.sflag [#allocation6], %s1460
          %s1462 = sand.u32 %s415, 1
          %s1463 = smul.addr %s1462, 16
          %s1464 = scalar_lea.vmem [#allocation16], %s1463
          %1466 = dma.done %s1461, 256
        $region124: #{tpu_custom_call.1} parent=119 // pred_fallthru
          _
      $region120: #{tpu_custom_call.1} parent=5 // pred_fallthru
        _
    $region6: #{tpu_custom_call.1} parent=1 // loop_footer
      %s39 = sadd.s32 1, %s35
    $region7: #{tpu_custom_call.1} parent=1 // loop_footer_branch
      %34 = sbr.rel target = $region3
    $region8: #{tpu_custom_call.1} parent=1 // loop_exit
      _
    %1467 = vsyncpa [#allocation5], 1
    %s1468 = scalar_lea.sflag [#allocation5], 1
    %1469 = vsyncpa %s1468, 1
    %1470 = vsyncpa [#allocation8], 1
    %s1471 = scalar_lea.sflag [#allocation8], 1
    %1472 = vsyncpa %s1471, 1
    %1473 = vsyncpa [#allocation11], 1
    %s1474 = scalar_lea.sflag [#allocation11], 1
    %1475 = vsyncpa %s1474, 1
    %1476 = vsyncpa [#allocation14], 1
    %s1477 = scalar_lea.sflag [#allocation14], 1
    %1478 = vsyncpa %s1477, 1
    %1479 = vsyncpa [#allocation6], 1
    %s1480 = scalar_lea.sflag [#allocation6], 1
    %1481 = vsyncpa %s1480, 1

</llo_original>
